<compile_context>
chip_gen: v5e
topology: v5e:2x2
jax: 0.10.0
libtpu: 0.0.40
codegen_flags: <defaults>
</compile_context>

<pallas_src>
import jax
import jax.numpy as jnp
from jax import lax
from jax.experimental import pallas as pl
from jax.experimental.pallas import tpu as pltpu

LANE = 128       # TPU lane width; all channel axes padded to this
KH = KW = 3      # 3x3 convs
TAPS = KH * KW
STRIDE = 2
PAD = 1


# ----------------------------------------------------------------------------
# Pallas kernel: whole 3-stage backbone fused in one kernel body.
# refs = (p1, w1, b1, [g_s, w_s, b_s for s >= 2], out)
#   p1 : (M1, 128)           bf16  lane-dense im2col rows of the input image
#   w1 : (128, 128)          bf16  stage-1 weights, (9*Cin, Cout) zero-padded
#   g_s: (9*M_s, M_{s-1})    bf16  stacked 0/1 gather matrix (tap-major rows)
#   w_s: (9, 128, 128)       bf16  per-tap conv weights, zero-padded
#   b_s: (1, 128)            f32   bias, zero-padded
#   out: (M_last, 128)       f32
# ----------------------------------------------------------------------------
def _make_fused_backbone_kernel(num_stages, mouts):
    def kernel(*refs):
        p1_ref, w1_ref, b1_ref = refs[0], refs[1], refs[2]
        o_ref = refs[-1]

        # ---- stage 1: one MXU matmul on the host-built patch matrix ----
        acc = jnp.dot(p1_ref[...], w1_ref[...],
                      preferred_element_type=jnp.float32)
        act = jnp.maximum(acc + b1_ref[...], 0.0)            # (M1, 128) f32

        # ---- stages 2..n: stacked in-VMEM gather + per-tap weights ----
        for s in range(1, num_stages):
            g_ref, w_ref, b_ref = refs[3 * s], refs[3 * s + 1], refs[3 * s + 2]
            m_out = mouts[s]
            a_bf16 = act.astype(jnp.bfloat16)
            # One matmul gathers the rows for all 9 taps (exact: 0/1 matrix).
            gathered = jnp.dot(g_ref[...], a_bf16,
                               preferred_element_type=jnp.float32)
            gathered = gathered.astype(jnp.bfloat16)         # (9*Mout, 128)
            acc = jnp.zeros((m_out, LANE), jnp.float32)
            for t in range(TAPS):                            # unrolled, static
                tap = gathered[t * m_out:(t + 1) * m_out]    # sublane-aligned
                acc = acc + jnp.dot(tap, w_ref[t],
                                    preferred_element_type=jnp.float32)
            act = jnp.maximum(acc + b_ref[...], 0.0)         # bias+ReLU in f32

        o_ref[...] = act                                     # lane-dense store
    return kernel


def _zero_index_map(rank):
    zeros = (0,) * rank
    return lambda i: zeros


def fused_backbone_pallas(operands, mouts):
    """operands = [p1, w1, b1, g2, w2, b2, ...].  mouts[s] = rows of stage s."""
    in_specs = [pl.BlockSpec(a.shape, _zero_index_map(a.ndim)) for a in operands]
    m_last = mouts[-1]

    flops = 2 * operands[0].shape[0] * operands[0].shape[1] * LANE   # stage 1
    for s in range(1, len(mouts)):
        g = operands[3 * s]
        flops += 2 * g.shape[0] * g.shape[1] * LANE                  # gather
        flops += 2 * TAPS * mouts[s] * LANE * LANE                   # weights
    bytes_accessed = sum(int(a.size) * a.dtype.itemsize for a in operands)
    bytes_accessed += m_last * LANE * 4

    return pl.pallas_call(
        _make_fused_backbone_kernel(len(mouts), mouts),
        out_shape=jax.ShapeDtypeStruct((m_last, LANE), jnp.float32),
        grid=(1,),
        in_specs=in_specs,
        out_specs=pl.BlockSpec((m_last, LANE), lambda i: (0, 0)),
        compiler_params=pltpu.CompilerParams(
            dimension_semantics=("arbitrary",)),
        cost_estimate=pl.CostEstimate(flops=int(flops), transcendentals=0,
                                      bytes_accessed=int(bytes_accessed)),
    )(*operands)


# ----------------------------------------------------------------------------
# Host-side (trace-time) operand preparation — pure layout work, shape-only.
# ----------------------------------------------------------------------------
def _pad_last_to(x, n):
    pad = n - x.shape[-1]
    if pad <= 0:
        return x
    return jnp.pad(x, [(0, 0)] * (x.ndim - 1) + [(0, pad)])


def _out_hw(h, w):
    ho = (h + 2 * PAD - KH) // STRIDE + 1
    wo = (w + 2 * PAD - KW) // STRIDE + 1
    return ho, wo


def make_stage1_patches(x_nchw, ho, wo):
    """Host-side im2col of the (tiny) network input: (B*Ho*Wo, 9*C) rows,
    tap-major along channels to match the (kh, kw, cin, cout) weight flatten."""
    B, C, H, W = x_nchw.shape
    x = jnp.transpose(x_nchw, (0, 2, 3, 1))                       # NHWC
    xp = jnp.pad(x, ((0, 0), (PAD, PAD), (PAD, PAD), (0, 0)))
    taps = []
    for i in range(KH):
        for j in range(KW):
            taps.append(xp[:, i:i + STRIDE * ho:STRIDE,
                           j:j + STRIDE * wo:STRIDE, :])          # (B,Ho,Wo,C)
    return jnp.concatenate(taps, axis=-1).reshape(B * ho * wo, TAPS * C)


def make_gather_stack(B, Hi, Wi, Ho, Wo):
    """(9*B*Ho*Wo, B*Hi*Wi) stacked 0/1 gather matrix; block t=i*3+j selects
    input row (b, 2*ho+i-1, 2*wo+j-1); out-of-range taps are all-zero rows."""
    m_in = B * Hi * Wi
    bb = jnp.arange(B).reshape(B, 1, 1)
    ho = jnp.arange(Ho).reshape(1, Ho, 1)
    wo = jnp.arange(Wo).reshape(1, 1, Wo)
    mats = []
    for i in range(KH):
        for j in range(KW):
            hi = STRIDE * ho + i - PAD                            # (1,Ho,1)
            wi = STRIDE * wo + j - PAD                            # (1,1,Wo)
            valid = (hi >= 0) & (hi < Hi) & (wi >= 0) & (wi < Wi)
            valid = jnp.broadcast_to(valid, (B, Ho, Wo))
            rows = (bb * Hi + hi) * Wi + wi                       # (B,Ho,Wo)
            rows = jnp.where(valid, rows, 0)
            g = jax.nn.one_hot(rows.reshape(-1), m_in, dtype=jnp.float32)
            g = g * valid.reshape(-1, 1).astype(jnp.float32)
            mats.append(g)
    return jnp.concatenate(mats, axis=0)                          # (9*Mout,Min)


def make_backbone_params(in_ch=4, widths=(16, 32, 64), seed=0):
    """Deterministic synthetic params for the stand-in timm backbone.
    Weight layout (kh, kw, cin, cout)."""
    key = jax.random.PRNGKey(seed)
    params = []
    cin = in_ch
    for cout in widths:
        key, kw_, kb_ = jax.random.split(key, 3)
        fan_in = KH * KW * cin
        w = jax.random.normal(kw_, (KH, KW, cin, cout), jnp.float32) / jnp.sqrt(
            jnp.float32(fan_in))
        b = 0.01 * jax.random.normal(kb_, (cout,), jnp.float32)
        params.append((w, b))
        cin = cout
    return params


def timm_feature_extractor_wrapper_forward(x_nchw, params):
    """Mirrors TimmFeatureExtractorWrapper.forward: run the backbone and
    return the LAST feature map in NCHW."""
    B, C, H, W = x_nchw.shape
    assert C <= LANE and TAPS * C <= LANE

    # --- stage 1 operands: lane-dense im2col patch matrix + reshaped weights.
    w1, b1 = params[0]
    _, _, cin1, cout1 = w1.shape
    assert cin1 == C
    H1, W1 = _out_hw(H, W)
    p1 = make_stage1_patches(x_nchw, H1, W1)
    p1 = _pad_last_to(p1, LANE).astype(jnp.bfloat16)              # (M1, 128)
    w1m = w1.reshape(TAPS * cin1, cout1)
    w1m = jnp.pad(w1m, ((0, LANE - TAPS * cin1), (0, LANE - cout1)))
    w1m = w1m.astype(jnp.bfloat16)                                # (128, 128)
    b1p = jnp.pad(b1, (0, LANE - cout1)).reshape(1, LANE).astype(jnp.float32)

    operands = [p1, w1m, b1p]
    mouts = [B * H1 * W1]

    # --- stages 2..n operands: stacked gather matrices + padded weights.
    Hi, Wi = H1, W1
    for (w, b) in params[1:]:
        kh, kw, cin, cout = w.shape
        assert (kh, kw) == (KH, KW) and cin <= LANE and cout <= LANE
        Ho, Wo = _out_hw(Hi, Wi)
        G = make_gather_stack(B, Hi, Wi, Ho, Wo).astype(jnp.bfloat16)
        Wp = jnp.pad(w, ((0, 0), (0, 0), (0, LANE - cin), (0, LANE - cout)))
        Wp = Wp.reshape(TAPS, LANE, LANE).astype(jnp.bfloat16)
        bp = jnp.pad(b, (0, LANE - cout)).reshape(1, LANE).astype(jnp.float32)
        operands += [G, Wp, bp]
        mouts.append(B * Ho * Wo)
        Hi, Wi = Ho, Wo

    out_rows = fused_backbone_pallas(operands, mouts)             # (M_last,128)

    cout_last = params[-1][0].shape[-1]
    feat = out_rows[:, :cout_last].reshape(B, Hi, Wi, cout_last)  # strip pad
    return jnp.transpose(feat, (0, 3, 1, 2))                      # NHWC -> NCHW


# ----------------------------------------------------------------------------
# Pure-JAX reference (same bf16-in / f32-accumulate numerics) for validation.
# ----------------------------------------------------------------------------
def reference_forward(x_nchw, params):
    x = jnp.transpose(x_nchw, (0, 2, 3, 1)).astype(jnp.float32)
    for (w, b) in params:
        y = lax.conv_general_dilated(
            x.astype(jnp.bfloat16), w.astype(jnp.bfloat16),
            window_strides=(STRIDE, STRIDE),
            padding=((PAD, PAD), (PAD, PAD)),
            dimension_numbers=("NHWC", "HWIO", "NHWC"),
            preferred_element_type=jnp.float32)
        x = jnp.maximum(y + b[None, None, None, :].astype(jnp.float32), 0.0)
    return jnp.transpose(x, (0, 3, 1, 2))


# ----------------------------------------------------------------------------
if __name__ == "__main__":
    B, C, H, W = 2, 4, 16, 16
    key = jax.random.PRNGKey(0)
    x = jax.random.normal(key, (B, C, H, W), jnp.float32)

    params = make_backbone_params(in_ch=C, widths=(16, 32, 64), seed=0)

    out = timm_feature_extractor_wrapper_forward(x, params)
    out = jax.block_until_ready(out)

    # Sanity: last stage of a 3x stride-2 backbone on 16x16 -> (B, 64, 2, 2)
    assert out.shape == (B, 64, 2, 2), out.shape
    assert out.dtype == jnp.float32

    ref = jax.block_until_ready(reference_forward(x, params))
    max_err = float(jnp.max(jnp.abs(out - ref)))
    assert jnp.allclose(out, ref, rtol=2e-2, atol=2e-2), max_err

    print("KERNEL_OK")
</pallas_src>

<mosaic_0001>
module attributes {stable_mosaic.version = 11 : i64} {
  func.func @kernel(%arg0: i32, %arg1: memref<128x128xbf16, #tpu.memory_space<vmem>>, %arg2: memref<128x128xbf16, #tpu.memory_space<vmem>>, %arg3: memref<1x128xf32, #tpu.memory_space<vmem>>, %arg4: memref<288x128xbf16, #tpu.memory_space<vmem>>, %arg5: memref<9x128x128xbf16, #tpu.memory_space<vmem>>, %arg6: memref<1x128xf32, #tpu.memory_space<vmem>>, %arg7: memref<72x32xbf16, #tpu.memory_space<vmem>>, %arg8: memref<9x128x128xbf16, #tpu.memory_space<vmem>>, %arg9: memref<1x128xf32, #tpu.memory_space<vmem>>, %arg10: memref<8x128xf32, #tpu.memory_space<vmem>>) attributes {dimension_semantics = [#tpu.dimension_semantics<arbitrary>], iteration_bounds = array<i64: 1>, scalar_prefetch = 0 : i64, scratch_operands = 0 : i64, tpu.core_type = #tpu.core_type<tc>, window_params = [{pipeline_mode = #tpu.pipeline_mode<synchronous>, transform_indices = @transform_0, window_bounds = array<i64: 128, 128>}, {pipeline_mode = #tpu.pipeline_mode<synchronous>, transform_indices = @transform_1, window_bounds = array<i64: 128, 128>}, {pipeline_mode = #tpu.pipeline_mode<synchronous>, transform_indices = @transform_2, window_bounds = array<i64: 1, 128>}, {pipeline_mode = #tpu.pipeline_mode<synchronous>, transform_indices = @transform_3, window_bounds = array<i64: 288, 128>}, {pipeline_mode = #tpu.pipeline_mode<synchronous>, transform_indices = @transform_4, window_bounds = array<i64: 9, 128, 128>}, {pipeline_mode = #tpu.pipeline_mode<synchronous>, transform_indices = @transform_5, window_bounds = array<i64: 1, 128>}, {pipeline_mode = #tpu.pipeline_mode<synchronous>, transform_indices = @transform_6, window_bounds = array<i64: 72, 32>}, {pipeline_mode = #tpu.pipeline_mode<synchronous>, transform_indices = @transform_7, window_bounds = array<i64: 9, 128, 128>}, {pipeline_mode = #tpu.pipeline_mode<synchronous>, transform_indices = @transform_8, window_bounds = array<i64: 1, 128>}, {pipeline_mode = #tpu.pipeline_mode<synchronous>, transform_indices = @transform_9, window_bounds = array<i64: 8, 128>}]} {
    %c0 = arith.constant 0 : index
    %c0_0 = arith.constant 0 : index
    %0 = vector.load %arg1[%c0, %c0_0] : memref<128x128xbf16, #tpu.memory_space<vmem>>, vector<128x128xbf16>
    %c0_1 = arith.constant 0 : index
    %c0_2 = arith.constant 0 : index
    %1 = vector.load %arg2[%c0_1, %c0_2] : memref<128x128xbf16, #tpu.memory_space<vmem>>, vector<128x128xbf16>
    %cst = arith.constant dense<0.000000e+00> : vector<128x128xf32>
    %2 = tpu.matmul %0, %1, %cst {dimension_numbers = #tpu.dot_dimension_numbers<[1], [0], [0], [1], [0, 0, 1, 1], [], []>} : vector<128x128xbf16>, vector<128x128xbf16>, vector<128x128xf32> -> vector<128x128xf32>
    %c0_3 = arith.constant 0 : index
    %c0_4 = arith.constant 0 : index
    %3 = vector.load %arg3[%c0_3, %c0_4] : memref<1x128xf32, #tpu.memory_space<vmem>>, vector<1x128xf32>
    %4 = vector.broadcast %3 : vector<1x128xf32> to vector<128x128xf32>
    %5 = arith.addf %2, %4 : vector<128x128xf32>
    %cst_5 = arith.constant 0.000000e+00 : f32
    %6 = vector.broadcast %cst_5 : f32 to vector<128x128xf32>
    %7 = arith.maximumf %5, %6 : vector<128x128xf32>
    %8 = arith.truncf %7 : vector<128x128xf32> to vector<128x128xbf16>
    %c0_6 = arith.constant 0 : index
    %c0_7 = arith.constant 0 : index
    %9 = vector.load %arg4[%c0_6, %c0_7] : memref<288x128xbf16, #tpu.memory_space<vmem>>, vector<288x128xbf16>
    %cst_8 = arith.constant dense<0.000000e+00> : vector<288x128xf32>
    %10 = tpu.matmul %9, %8, %cst_8 {dimension_numbers = #tpu.dot_dimension_numbers<[1], [0], [0], [1], [0, 0, 1, 1], [], []>} : vector<288x128xbf16>, vector<128x128xbf16>, vector<288x128xf32> -> vector<288x128xf32>
    %11 = arith.truncf %10 : vector<288x128xf32> to vector<288x128xbf16>
    %cst_9 = arith.constant 0.000000e+00 : f32
    %12 = vector.broadcast %cst_9 : f32 to vector<32x128xf32>
    %13 = vector.extract_strided_slice %11 {offsets = [0, 0], sizes = [32, 128], strides = [1, 1]} : vector<288x128xbf16> to vector<32x128xbf16>
    %c0_10 = arith.constant 0 : index
    %c0_11 = arith.constant 0 : index
    %c0_12 = arith.constant 0 : index
    %14 = vector.load %arg5[%c0_10, %c0_11, %c0_12] : memref<9x128x128xbf16, #tpu.memory_space<vmem>>, vector<1x128x128xbf16>
    %15 = vector.shape_cast %14 : vector<1x128x128xbf16> to vector<128x128xbf16>
    %cst_13 = arith.constant dense<0.000000e+00> : vector<32x128xf32>
    %16 = tpu.matmul %13, %15, %cst_13 {dimension_numbers = #tpu.dot_dimension_numbers<[1], [0], [0], [1], [0, 0, 1, 1], [], []>} : vector<32x128xbf16>, vector<128x128xbf16>, vector<32x128xf32> -> vector<32x128xf32>
    %17 = arith.addf %12, %16 : vector<32x128xf32>
    %18 = vector.extract_strided_slice %11 {offsets = [32, 0], sizes = [32, 128], strides = [1, 1]} : vector<288x128xbf16> to vector<32x128xbf16>
    %c1 = arith.constant 1 : index
    %c0_14 = arith.constant 0 : index
    %c0_15 = arith.constant 0 : index
    %19 = vector.load %arg5[%c1, %c0_14, %c0_15] : memref<9x128x128xbf16, #tpu.memory_space<vmem>>, vector<1x128x128xbf16>
    %20 = vector.shape_cast %19 : vector<1x128x128xbf16> to vector<128x128xbf16>
    %cst_16 = arith.constant dense<0.000000e+00> : vector<32x128xf32>
    %21 = tpu.matmul %18, %20, %cst_16 {dimension_numbers = #tpu.dot_dimension_numbers<[1], [0], [0], [1], [0, 0, 1, 1], [], []>} : vector<32x128xbf16>, vector<128x128xbf16>, vector<32x128xf32> -> vector<32x128xf32>
    %22 = arith.addf %17, %21 : vector<32x128xf32>
    %23 = vector.extract_strided_slice %11 {offsets = [64, 0], sizes = [32, 128], strides = [1, 1]} : vector<288x128xbf16> to vector<32x128xbf16>
    %c2 = arith.constant 2 : index
    %c0_17 = arith.constant 0 : index
    %c0_18 = arith.constant 0 : index
    %24 = vector.load %arg5[%c2, %c0_17, %c0_18] : memref<9x128x128xbf16, #tpu.memory_space<vmem>>, vector<1x128x128xbf16>
    %25 = vector.shape_cast %24 : vector<1x128x128xbf16> to vector<128x128xbf16>
    %cst_19 = arith.constant dense<0.000000e+00> : vector<32x128xf32>
    %26 = tpu.matmul %23, %25, %cst_19 {dimension_numbers = #tpu.dot_dimension_numbers<[1], [0], [0], [1], [0, 0, 1, 1], [], []>} : vector<32x128xbf16>, vector<128x128xbf16>, vector<32x128xf32> -> vector<32x128xf32>
    %27 = arith.addf %22, %26 : vector<32x128xf32>
    %28 = vector.extract_strided_slice %11 {offsets = [96, 0], sizes = [32, 128], strides = [1, 1]} : vector<288x128xbf16> to vector<32x128xbf16>
    %c3 = arith.constant 3 : index
    %c0_20 = arith.constant 0 : index
    %c0_21 = arith.constant 0 : index
    %29 = vector.load %arg5[%c3, %c0_20, %c0_21] : memref<9x128x128xbf16, #tpu.memory_space<vmem>>, vector<1x128x128xbf16>
    %30 = vector.shape_cast %29 : vector<1x128x128xbf16> to vector<128x128xbf16>
    %cst_22 = arith.constant dense<0.000000e+00> : vector<32x128xf32>
    %31 = tpu.matmul %28, %30, %cst_22 {dimension_numbers = #tpu.dot_dimension_numbers<[1], [0], [0], [1], [0, 0, 1, 1], [], []>} : vector<32x128xbf16>, vector<128x128xbf16>, vector<32x128xf32> -> vector<32x128xf32>
    %32 = arith.addf %27, %31 : vector<32x128xf32>
    %33 = vector.extract_strided_slice %11 {offsets = [128, 0], sizes = [32, 128], strides = [1, 1]} : vector<288x128xbf16> to vector<32x128xbf16>
    %c4 = arith.constant 4 : index
    %c0_23 = arith.constant 0 : index
    %c0_24 = arith.constant 0 : index
    %34 = vector.load %arg5[%c4, %c0_23, %c0_24] : memref<9x128x128xbf16, #tpu.memory_space<vmem>>, vector<1x128x128xbf16>
    %35 = vector.shape_cast %34 : vector<1x128x128xbf16> to vector<128x128xbf16>
    %cst_25 = arith.constant dense<0.000000e+00> : vector<32x128xf32>
    %36 = tpu.matmul %33, %35, %cst_25 {dimension_numbers = #tpu.dot_dimension_numbers<[1], [0], [0], [1], [0, 0, 1, 1], [], []>} : vector<32x128xbf16>, vector<128x128xbf16>, vector<32x128xf32> -> vector<32x128xf32>
    %37 = arith.addf %32, %36 : vector<32x128xf32>
    %38 = vector.extract_strided_slice %11 {offsets = [160, 0], sizes = [32, 128], strides = [1, 1]} : vector<288x128xbf16> to vector<32x128xbf16>
    %c5 = arith.constant 5 : index
    %c0_26 = arith.constant 0 : index
    %c0_27 = arith.constant 0 : index
    %39 = vector.load %arg5[%c5, %c0_26, %c0_27] : memref<9x128x128xbf16, #tpu.memory_space<vmem>>, vector<1x128x128xbf16>
    %40 = vector.shape_cast %39 : vector<1x128x128xbf16> to vector<128x128xbf16>
    %cst_28 = arith.constant dense<0.000000e+00> : vector<32x128xf32>
    %41 = tpu.matmul %38, %40, %cst_28 {dimension_numbers = #tpu.dot_dimension_numbers<[1], [0], [0], [1], [0, 0, 1, 1], [], []>} : vector<32x128xbf16>, vector<128x128xbf16>, vector<32x128xf32> -> vector<32x128xf32>
    %42 = arith.addf %37, %41 : vector<32x128xf32>
    %43 = vector.extract_strided_slice %11 {offsets = [192, 0], sizes = [32, 128], strides = [1, 1]} : vector<288x128xbf16> to vector<32x128xbf16>
    %c6 = arith.constant 6 : index
    %c0_29 = arith.constant 0 : index
    %c0_30 = arith.constant 0 : index
    %44 = vector.load %arg5[%c6, %c0_29, %c0_30] : memref<9x128x128xbf16, #tpu.memory_space<vmem>>, vector<1x128x128xbf16>
    %45 = vector.shape_cast %44 : vector<1x128x128xbf16> to vector<128x128xbf16>
    %cst_31 = arith.constant dense<0.000000e+00> : vector<32x128xf32>
    %46 = tpu.matmul %43, %45, %cst_31 {dimension_numbers = #tpu.dot_dimension_numbers<[1], [0], [0], [1], [0, 0, 1, 1], [], []>} : vector<32x128xbf16>, vector<128x128xbf16>, vector<32x128xf32> -> vector<32x128xf32>
    %47 = arith.addf %42, %46 : vector<32x128xf32>
    %48 = vector.extract_strided_slice %11 {offsets = [224, 0], sizes = [32, 128], strides = [1, 1]} : vector<288x128xbf16> to vector<32x128xbf16>
    %c7 = arith.constant 7 : index
    %c0_32 = arith.constant 0 : index
    %c0_33 = arith.constant 0 : index
    %49 = vector.load %arg5[%c7, %c0_32, %c0_33] : memref<9x128x128xbf16, #tpu.memory_space<vmem>>, vector<1x128x128xbf16>
    %50 = vector.shape_cast %49 : vector<1x128x128xbf16> to vector<128x128xbf16>
    %cst_34 = arith.constant dense<0.000000e+00> : vector<32x128xf32>
    %51 = tpu.matmul %48, %50, %cst_34 {dimension_numbers = #tpu.dot_dimension_numbers<[1], [0], [0], [1], [0, 0, 1, 1], [], []>} : vector<32x128xbf16>, vector<128x128xbf16>, vector<32x128xf32> -> vector<32x128xf32>
    %52 = arith.addf %47, %51 : vector<32x128xf32>
    %53 = vector.extract_strided_slice %11 {offsets = [256, 0], sizes = [32, 128], strides = [1, 1]} : vector<288x128xbf16> to vector<32x128xbf16>
    %c8 = arith.constant 8 : index
    %c0_35 = arith.constant 0 : index
    %c0_36 = arith.constant 0 : index
    %54 = vector.load %arg5[%c8, %c0_35, %c0_36] : memref<9x128x128xbf16, #tpu.memory_space<vmem>>, vector<1x128x128xbf16>
    %55 = vector.shape_cast %54 : vector<1x128x128xbf16> to vector<128x128xbf16>
    %cst_37 = arith.constant dense<0.000000e+00> : vector<32x128xf32>
    %56 = tpu.matmul %53, %55, %cst_37 {dimension_numbers = #tpu.dot_dimension_numbers<[1], [0], [0], [1], [0, 0, 1, 1], [], []>} : vector<32x128xbf16>, vector<128x128xbf16>, vector<32x128xf32> -> vector<32x128xf32>
    %57 = arith.addf %52, %56 : vector<32x128xf32>
    %c0_38 = arith.constant 0 : index
    %c0_39 = arith.constant 0 : index
    %58 = vector.load %arg6[%c0_38, %c0_39] : memref<1x128xf32, #tpu.memory_space<vmem>>, vector<1x128xf32>
    %59 = vector.broadcast %58 : vector<1x128xf32> to vector<32x128xf32>
    %60 = arith.addf %57, %59 : vector<32x128xf32>
    %cst_40 = arith.constant 0.000000e+00 : f32
    %61 = vector.broadcast %cst_40 : f32 to vector<32x128xf32>
    %62 = arith.maximumf %60, %61 : vector<32x128xf32>
    %63 = arith.truncf %62 : vector<32x128xf32> to vector<32x128xbf16>
    %c0_41 = arith.constant 0 : index
    %c0_42 = arith.constant 0 : index
    %64 = vector.load %arg7[%c0_41, %c0_42] : memref<72x32xbf16, #tpu.memory_space<vmem>>, vector<72x32xbf16>
    %cst_43 = arith.constant dense<0.000000e+00> : vector<72x128xf32>
    %65 = tpu.matmul %64, %63, %cst_43 {dimension_numbers = #tpu.dot_dimension_numbers<[1], [0], [0], [1], [0, 0, 1, 1], [], []>} : vector<72x32xbf16>, vector<32x128xbf16>, vector<72x128xf32> -> vector<72x128xf32>
    %66 = arith.truncf %65 : vector<72x128xf32> to vector<72x128xbf16>
    %cst_44 = arith.constant 0.000000e+00 : f32
    %67 = vector.broadcast %cst_44 : f32 to vector<8x128xf32>
    %68 = vector.extract_strided_slice %66 {offsets = [0, 0], sizes = [8, 128], strides = [1, 1]} : vector<72x128xbf16> to vector<8x128xbf16>
    %c0_45 = arith.constant 0 : index
    %c0_46 = arith.constant 0 : index
    %c0_47 = arith.constant 0 : index
    %69 = vector.load %arg8[%c0_45, %c0_46, %c0_47] : memref<9x128x128xbf16, #tpu.memory_space<vmem>>, vector<1x128x128xbf16>
    %70 = vector.shape_cast %69 : vector<1x128x128xbf16> to vector<128x128xbf16>
    %cst_48 = arith.constant dense<0.000000e+00> : vector<8x128xf32>
    %71 = tpu.matmul %68, %70, %cst_48 {dimension_numbers = #tpu.dot_dimension_numbers<[1], [0], [0], [1], [0, 0, 1, 1], [], []>} : vector<8x128xbf16>, vector<128x128xbf16>, vector<8x128xf32> -> vector<8x128xf32>
    %72 = arith.addf %67, %71 : vector<8x128xf32>
    %73 = vector.extract_strided_slice %66 {offsets = [8, 0], sizes = [8, 128], strides = [1, 1]} : vector<72x128xbf16> to vector<8x128xbf16>
    %c1_49 = arith.constant 1 : index
    %c0_50 = arith.constant 0 : index
    %c0_51 = arith.constant 0 : index
    %74 = vector.load %arg8[%c1_49, %c0_50, %c0_51] : memref<9x128x128xbf16, #tpu.memory_space<vmem>>, vector<1x128x128xbf16>
    %75 = vector.shape_cast %74 : vector<1x128x128xbf16> to vector<128x128xbf16>
    %cst_52 = arith.constant dense<0.000000e+00> : vector<8x128xf32>
    %76 = tpu.matmul %73, %75, %cst_52 {dimension_numbers = #tpu.dot_dimension_numbers<[1], [0], [0], [1], [0, 0, 1, 1], [], []>} : vector<8x128xbf16>, vector<128x128xbf16>, vector<8x128xf32> -> vector<8x128xf32>
    %77 = arith.addf %72, %76 : vector<8x128xf32>
    %78 = vector.extract_strided_slice %66 {offsets = [16, 0], sizes = [8, 128], strides = [1, 1]} : vector<72x128xbf16> to vector<8x128xbf16>
    %c2_53 = arith.constant 2 : index
    %c0_54 = arith.constant 0 : index
    %c0_55 = arith.constant 0 : index
    %79 = vector.load %arg8[%c2_53, %c0_54, %c0_55] : memref<9x128x128xbf16, #tpu.memory_space<vmem>>, vector<1x128x128xbf16>
    %80 = vector.shape_cast %79 : vector<1x128x128xbf16> to vector<128x128xbf16>
    %cst_56 = arith.constant dense<0.000000e+00> : vector<8x128xf32>
    %81 = tpu.matmul %78, %80, %cst_56 {dimension_numbers = #tpu.dot_dimension_numbers<[1], [0], [0], [1], [0, 0, 1, 1], [], []>} : vector<8x128xbf16>, vector<128x128xbf16>, vector<8x128xf32> -> vector<8x128xf32>
    %82 = arith.addf %77, %81 : vector<8x128xf32>
    %83 = vector.extract_strided_slice %66 {offsets = [24, 0], sizes = [8, 128], strides = [1, 1]} : vector<72x128xbf16> to vector<8x128xbf16>
    %c3_57 = arith.constant 3 : index
    %c0_58 = arith.constant 0 : index
    %c0_59 = arith.constant 0 : index
    %84 = vector.load %arg8[%c3_57, %c0_58, %c0_59] : memref<9x128x128xbf16, #tpu.memory_space<vmem>>, vector<1x128x128xbf16>
    %85 = vector.shape_cast %84 : vector<1x128x128xbf16> to vector<128x128xbf16>
    %cst_60 = arith.constant dense<0.000000e+00> : vector<8x128xf32>
    %86 = tpu.matmul %83, %85, %cst_60 {dimension_numbers = #tpu.dot_dimension_numbers<[1], [0], [0], [1], [0, 0, 1, 1], [], []>} : vector<8x128xbf16>, vector<128x128xbf16>, vector<8x128xf32> -> vector<8x128xf32>
    %87 = arith.addf %82, %86 : vector<8x128xf32>
    %88 = vector.extract_strided_slice %66 {offsets = [32, 0], sizes = [8, 128], strides = [1, 1]} : vector<72x128xbf16> to vector<8x128xbf16>
    %c4_61 = arith.constant 4 : index
    %c0_62 = arith.constant 0 : index
    %c0_63 = arith.constant 0 : index
    %89 = vector.load %arg8[%c4_61, %c0_62, %c0_63] : memref<9x128x128xbf16, #tpu.memory_space<vmem>>, vector<1x128x128xbf16>
    %90 = vector.shape_cast %89 : vector<1x128x128xbf16> to vector<128x128xbf16>
    %cst_64 = arith.constant dense<0.000000e+00> : vector<8x128xf32>
    %91 = tpu.matmul %88, %90, %cst_64 {dimension_numbers = #tpu.dot_dimension_numbers<[1], [0], [0], [1], [0, 0, 1, 1], [], []>} : vector<8x128xbf16>, vector<128x128xbf16>, vector<8x128xf32> -> vector<8x128xf32>
    %92 = arith.addf %87, %91 : vector<8x128xf32>
    %93 = vector.extract_strided_slice %66 {offsets = [40, 0], sizes = [8, 128], strides = [1, 1]} : vector<72x128xbf16> to vector<8x128xbf16>
    %c5_65 = arith.constant 5 : index
    %c0_66 = arith.constant 0 : index
    %c0_67 = arith.constant 0 : index
    %94 = vector.load %arg8[%c5_65, %c0_66, %c0_67] : memref<9x128x128xbf16, #tpu.memory_space<vmem>>, vector<1x128x128xbf16>
    %95 = vector.shape_cast %94 : vector<1x128x128xbf16> to vector<128x128xbf16>
    %cst_68 = arith.constant dense<0.000000e+00> : vector<8x128xf32>
    %96 = tpu.matmul %93, %95, %cst_68 {dimension_numbers = #tpu.dot_dimension_numbers<[1], [0], [0], [1], [0, 0, 1, 1], [], []>} : vector<8x128xbf16>, vector<128x128xbf16>, vector<8x128xf32> -> vector<8x128xf32>
    %97 = arith.addf %92, %96 : vector<8x128xf32>
    %98 = vector.extract_strided_slice %66 {offsets = [48, 0], sizes = [8, 128], strides = [1, 1]} : vector<72x128xbf16> to vector<8x128xbf16>
    %c6_69 = arith.constant 6 : index
    %c0_70 = arith.constant 0 : index
    %c0_71 = arith.constant 0 : index
    %99 = vector.load %arg8[%c6_69, %c0_70, %c0_71] : memref<9x128x128xbf16, #tpu.memory_space<vmem>>, vector<1x128x128xbf16>
    %100 = vector.shape_cast %99 : vector<1x128x128xbf16> to vector<128x128xbf16>
    %cst_72 = arith.constant dense<0.000000e+00> : vector<8x128xf32>
    %101 = tpu.matmul %98, %100, %cst_72 {dimension_numbers = #tpu.dot_dimension_numbers<[1], [0], [0], [1], [0, 0, 1, 1], [], []>} : vector<8x128xbf16>, vector<128x128xbf16>, vector<8x128xf32> -> vector<8x128xf32>
    %102 = arith.addf %97, %101 : vector<8x128xf32>
    %103 = vector.extract_strided_slice %66 {offsets = [56, 0], sizes = [8, 128], strides = [1, 1]} : vector<72x128xbf16> to vector<8x128xbf16>
    %c7_73 = arith.constant 7 : index
    %c0_74 = arith.constant 0 : index
    %c0_75 = arith.constant 0 : index
    %104 = vector.load %arg8[%c7_73, %c0_74, %c0_75] : memref<9x128x128xbf16, #tpu.memory_space<vmem>>, vector<1x128x128xbf16>
    %105 = vector.shape_cast %104 : vector<1x128x128xbf16> to vector<128x128xbf16>
    %cst_76 = arith.constant dense<0.000000e+00> : vector<8x128xf32>
    %106 = tpu.matmul %103, %105, %cst_76 {dimension_numbers = #tpu.dot_dimension_numbers<[1], [0], [0], [1], [0, 0, 1, 1], [], []>} : vector<8x128xbf16>, vector<128x128xbf16>, vector<8x128xf32> -> vector<8x128xf32>
    %107 = arith.addf %102, %106 : vector<8x128xf32>
    %108 = vector.extract_strided_slice %66 {offsets = [64, 0], sizes = [8, 128], strides = [1, 1]} : vector<72x128xbf16> to vector<8x128xbf16>
    %c8_77 = arith.constant 8 : index
    %c0_78 = arith.constant 0 : index
    %c0_79 = arith.constant 0 : index
    %109 = vector.load %arg8[%c8_77, %c0_78, %c0_79] : memref<9x128x128xbf16, #tpu.memory_space<vmem>>, vector<1x128x128xbf16>
    %110 = vector.shape_cast %109 : vector<1x128x128xbf16> to vector<128x128xbf16>
    %cst_80 = arith.constant dense<0.000000e+00> : vector<8x128xf32>
    %111 = tpu.matmul %108, %110, %cst_80 {dimension_numbers = #tpu.dot_dimension_numbers<[1], [0], [0], [1], [0, 0, 1, 1], [], []>} : vector<8x128xbf16>, vector<128x128xbf16>, vector<8x128xf32> -> vector<8x128xf32>
    %112 = arith.addf %107, %111 : vector<8x128xf32>
    %c0_81 = arith.constant 0 : index
    %c0_82 = arith.constant 0 : index
    %113 = vector.load %arg9[%c0_81, %c0_82] : memref<1x128xf32, #tpu.memory_space<vmem>>, vector<1x128xf32>
    %114 = vector.broadcast %113 : vector<1x128xf32> to vector<8x128xf32>
    %115 = arith.addf %112, %114 : vector<8x128xf32>
    %cst_83 = arith.constant 0.000000e+00 : f32
    %116 = vector.broadcast %cst_83 : f32 to vector<8x128xf32>
    %117 = arith.maximumf %115, %116 : vector<8x128xf32>
    %c0_84 = arith.constant 0 : index
    %c0_85 = arith.constant 0 : index
    %118 = vector.load %arg10[%c0_84, %c0_85] : memref<8x128xf32, #tpu.memory_space<vmem>>, vector<8x128xf32>
    tpu.vector_store %arg10[%c0_84, %c0_85], %117 {strides = array<i32>} : memref<8x128xf32, #tpu.memory_space<vmem>>, vector<8x128xf32>,
    return
  }
  func.func @transform_0(%arg0: i32) -> (i32, i32) {
    %c0_i32 = arith.constant 0 : i32
    %c0_i32_0 = arith.constant 0 : i32
    %c0_i32_1 = arith.constant 0 : i32
    return %c0_i32, %c0_i32_0 : i32, i32
  }
  func.func @transform_1(%arg0: i32) -> (i32, i32) {
    %c0_i32 = arith.constant 0 : i32
    %c0_i32_0 = arith.constant 0 : i32
    %c0_i32_1 = arith.constant 0 : i32
    return %c0_i32, %c0_i32_0 : i32, i32
  }
  func.func @transform_2(%arg0: i32) -> (i32, i32) {
    %c0_i32 = arith.constant 0 : i32
    %c0_i32_0 = arith.constant 0 : i32
    %c0_i32_1 = arith.constant 0 : i32
    return %c0_i32, %c0_i32_0 : i32, i32
  }
  func.func @transform_3(%arg0: i32) -> (i32, i32) {
    %c0_i32 = arith.constant 0 : i32
    %c0_i32_0 = arith.constant 0 : i32
    %c0_i32_1 = arith.constant 0 : i32
    return %c0_i32, %c0_i32_0 : i32, i32
  }
  func.func @transform_4(%arg0: i32) -> (i32, i32, i32) {
    %c0_i32 = arith.constant 0 : i32
    %c0_i32_0 = arith.constant 0 : i32
    %c0_i32_1 = arith.constant 0 : i32
    %c0_i32_2 = arith.constant 0 : i32
    return %c0_i32, %c0_i32_0, %c0_i32_1 : i32, i32, i32
  }
  func.func @transform_5(%arg0: i32) -> (i32, i32) {
    %c0_i32 = arith.constant 0 : i32
    %c0_i32_0 = arith.constant 0 : i32
    %c0_i32_1 = arith.constant 0 : i32
    return %c0_i32, %c0_i32_0 : i32, i32
  }
  func.func @transform_6(%arg0: i32) -> (i32, i32) {
    %c0_i32 = arith.constant 0 : i32
    %c0_i32_0 = arith.constant 0 : i32
    %c0_i32_1 = arith.constant 0 : i32
    return %c0_i32, %c0_i32_0 : i32, i32
  }
  func.func @transform_7(%arg0: i32) -> (i32, i32, i32) {
    %c0_i32 = arith.constant 0 : i32
    %c0_i32_0 = arith.constant 0 : i32
    %c0_i32_1 = arith.constant 0 : i32
    %c0_i32_2 = arith.constant 0 : i32
    return %c0_i32, %c0_i32_0, %c0_i32_1 : i32, i32, i32
  }
  func.func @transform_8(%arg0: i32) -> (i32, i32) {
    %c0_i32 = arith.constant 0 : i32
    %c0_i32_0 = arith.constant 0 : i32
    %c0_i32_1 = arith.constant 0 : i32
    return %c0_i32, %c0_i32_0 : i32, i32
  }
  func.func @transform_9(%arg0: i32) -> (i32, i32) {
    %c0_i32 = arith.constant 0 : i32
    %c0_i32_0 = arith.constant 0 : i32
    %c0_i32_1 = arith.constant 0 : i32
    return %c0_i32, %c0_i32_0 : i32, i32
  }
}

</mosaic_0001>

<llo_original>
// kernel: tpu_custom_call.1
$region0: #{tpu_custom_call.1}
  #allocation0 [shape = 'u32[]', space=smem, size = 0x4, offset = 0x4, fixed_abs, tag = 'smem constant byte address 0x4 - core index']
  #allocation1 [shape = 'u32[72,128]{1,0:T(1,128)}', space=vmem, size = 0x9000, scoped, tag = 'internal scratch']
  %s0 = inlined_call_operand.hbm [shape: bf16[128,128], index: 0, kind: input, shape index: {}]
  %s1 = inlined_call_operand.hbm [shape: bf16[128,128], index: 1, kind: input, shape index: {}]
  %s2 = inlined_call_operand.vmem [shape: f32[1,128], index: 2, kind: input, shape index: {}]
  %s3 = inlined_call_operand.hbm [shape: bf16[288,128], index: 3, kind: input, shape index: {}]
  %s4 = inlined_call_operand.hbm [shape: bf16[9,128,128], index: 4, kind: input, shape index: {}]
  %s5 = inlined_call_operand.vmem [shape: f32[1,128], index: 5, kind: input, shape index: {}]
  %s6 = inlined_call_operand.vmem [shape: bf16[72,32], index: 6, kind: input, shape index: {}]
  %s7 = inlined_call_operand.hbm [shape: bf16[9,128,128], index: 7, kind: input, shape index: {}]
  %s8 = inlined_call_operand.vmem [shape: f32[1,128], index: 8, kind: input, shape index: {}]
  %s9 = inlined_call_operand.hbm [shape: f32[8,128], index: 9, kind: output, shape index: {}]
  %s10 = sld [smem:[#allocation0]]
  $region66: #{tpu_custom_call.1} parent=0
    _
  %s12 = ssub.s32 1, %s10
  %s13 = scalar_select 0, %s12, %s10
  $region1: #{tpu_custom_call.1} parent=0
    #allocation2 [shape = 'u8[32768]{0}', space=vmem, size = 0x8000, scoped, tag = 'input window, operand 0, single buffered']
    #allocation3 [shape = 's32[1]{0}', space=sflag, size = 0x4, scoped, tag = 'scoped memory for tpu_custom_call.1']
    #allocation4 [shape = 's32[1]{0}', space=sflag, size = 0x4, scoped, tag = 'scoped memory for tpu_custom_call.1']
    #allocation5 [shape = 'u8[32768]{0}', space=vmem, size = 0x8000, scoped, tag = 'input window, operand 1, single buffered']
    #allocation6 [shape = 's32[1]{0}', space=sflag, size = 0x4, scoped, tag = 'scoped memory for tpu_custom_call.1']
    #allocation7 [shape = 'u8[73728]{0}', space=vmem, size = 0x12000, scoped, tag = 'input window, operand 3, single buffered']
    #allocation8 [shape = 'u8[294912]{0}', space=vmem, size = 0x48000, scoped, tag = 'input window, operand 4, single buffered']
    #allocation9 [shape = 's32[1]{0}', space=sflag, size = 0x4, scoped, tag = 'scoped memory for tpu_custom_call.1']
    #allocation10 [shape = 'u8[294912]{0}', space=vmem, size = 0x48000, scoped, tag = 'input window, operand 7, single buffered']
    #allocation11 [shape = 'u8[4096]{0}', space=vmem, size = 0x1000, scoped, tag = 'output window, operand 0, single buffered']
    %14 = vsyncpa [#allocation3], 0
    %15 = vsyncpa [#allocation6], 0
    %16 = vsyncpa [#allocation9], 0
    %17 = vsyncpa [#allocation4], 0
    // Predicated region
    $region2: #{tpu_custom_call.1} parent=1 // pred_check
      _
    $region3: #{tpu_custom_call.1} parent=1 // pred_check_branch
      %19 = sbr.rel (0) target = $region5
    $region4: #{tpu_custom_call.1} parent=1 // pred_region
      %21 = vsyncadd [#allocation3], 0
      %s22 = sshll.u32 %s0, 4
      %s23 = int_to_ptr.hbm [resolvable:$true] %s22
      %s24 = sshll.u32 [#allocation2], 4
      %s25 = int_to_ptr.vmem [resolvable:$true] %s24
      %30 = dma.hbm_to_vmem [thread:$0]  %s23, 1024, %s25, [#allocation3], 64, 64, 4
    $region5: #{tpu_custom_call.1} parent=1 // pred_fallthru
      _
    // Predicated region
    $region6: #{tpu_custom_call.1} parent=1 // pred_check
      _
    $region7: #{tpu_custom_call.1} parent=1 // pred_check_branch
      %32 = sbr.rel (0) target = $region9
    $region8: #{tpu_custom_call.1} parent=1 // pred_region
      %34 = vsyncadd [#allocation6], 0
      %s35 = sshll.u32 %s1, 4
      %s36 = int_to_ptr.hbm [resolvable:$true] %s35
      %s37 = sshll.u32 [#allocation5], 4
      %s38 = int_to_ptr.vmem [resolvable:$true] %s37
      %43 = dma.hbm_to_vmem [thread:$0]  %s36, 1024, %s38, [#allocation6], 64, 64, 4
    $region9: #{tpu_custom_call.1} parent=1 // pred_fallthru
      _
    // Predicated region
    $region10: #{tpu_custom_call.1} parent=1 // pred_check
      _
    $region11: #{tpu_custom_call.1} parent=1 // pred_check_branch
      %45 = sbr.rel (0) target = $region13
    $region12: #{tpu_custom_call.1} parent=1 // pred_region
      _
    $region13: #{tpu_custom_call.1} parent=1 // pred_fallthru
      _
    // Predicated region
    $region14: #{tpu_custom_call.1} parent=1 // pred_check
      _
    $region15: #{tpu_custom_call.1} parent=1 // pred_check_branch
      %47 = sbr.rel (0) target = $region17
    $region16: #{tpu_custom_call.1} parent=1 // pred_region
      %49 = vsyncadd [#allocation6], 0
      %s50 = sshll.u32 %s3, 4
      %s51 = int_to_ptr.hbm [resolvable:$true] %s50
      %s52 = sshll.u32 [#allocation7], 4
      %s53 = int_to_ptr.vmem [resolvable:$true] %s52
      %58 = dma.hbm_to_vmem [thread:$0]  %s51, 2304, %s53, [#allocation6], 64, 64, 4
    $region17: #{tpu_custom_call.1} parent=1 // pred_fallthru
      _
    // Predicated region
    $region18: #{tpu_custom_call.1} parent=1 // pred_check
      _
    $region19: #{tpu_custom_call.1} parent=1 // pred_check_branch
      %60 = sbr.rel (0) target = $region21
    $region20: #{tpu_custom_call.1} parent=1 // pred_region
      %62 = vsyncadd [#allocation9], 0
      %s63 = sshll.u32 %s4, 4
      %s64 = int_to_ptr.hbm [resolvable:$true] %s63
      %s65 = sshll.u32 [#allocation8], 4
      %s66 = int_to_ptr.vmem [resolvable:$true] %s65
      %71 = dma.hbm_to_vmem [thread:$0]  %s64, 9216, %s66, [#allocation9], 64, 64, 4
    $region21: #{tpu_custom_call.1} parent=1 // pred_fallthru
      _
    // Predicated region
    $region22: #{tpu_custom_call.1} parent=1 // pred_check
      _
    $region23: #{tpu_custom_call.1} parent=1 // pred_check_branch
      %73 = sbr.rel (0) target = $region25
    $region24: #{tpu_custom_call.1} parent=1 // pred_region
      _
    $region25: #{tpu_custom_call.1} parent=1 // pred_fallthru
      _
    // Predicated region
    $region26: #{tpu_custom_call.1} parent=1 // pred_check
      _
    $region27: #{tpu_custom_call.1} parent=1 // pred_check_branch
      %75 = sbr.rel (0) target = $region29
    $region28: #{tpu_custom_call.1} parent=1 // pred_region
      _
    $region29: #{tpu_custom_call.1} parent=1 // pred_fallthru
      _
    // Predicated region
    $region30: #{tpu_custom_call.1} parent=1 // pred_check
      _
    $region31: #{tpu_custom_call.1} parent=1 // pred_check_branch
      %77 = sbr.rel (0) target = $region33
    $region32: #{tpu_custom_call.1} parent=1 // pred_region
      %79 = vsyncadd [#allocation9], 0
      %s80 = sshll.u32 %s7, 4
      %s81 = int_to_ptr.hbm [resolvable:$true] %s80
      %s82 = sshll.u32 [#allocation10], 4
      %s83 = int_to_ptr.vmem [resolvable:$true] %s82
      %88 = dma.hbm_to_vmem [thread:$0]  %s81, 9216, %s83, [#allocation9], 64, 64, 4
    $region33: #{tpu_custom_call.1} parent=1 // pred_fallthru
      _
    // Predicated region
    $region34: #{tpu_custom_call.1} parent=1 // pred_check
      _
    $region35: #{tpu_custom_call.1} parent=1 // pred_check_branch
      %90 = sbr.rel (0) target = $region37
    $region36: #{tpu_custom_call.1} parent=1 // pred_region
      _
    $region37: #{tpu_custom_call.1} parent=1 // pred_fallthru
      _
    // Predicated region
    $region38: #{tpu_custom_call.1} parent=1 // pred_check
      _
    $region39: #{tpu_custom_call.1} parent=1 // pred_check_branch
      %92 = sbr.rel (0) target = $region41
    $region40: #{tpu_custom_call.1} parent=1 // pred_region
      %94 = dma.done [#allocation3], 1024
    $region41: #{tpu_custom_call.1} parent=1 // pred_fallthru
      _
    // Predicated region
    $region42: #{tpu_custom_call.1} parent=1 // pred_check
      _
    $region43: #{tpu_custom_call.1} parent=1 // pred_check_branch
      %96 = sbr.rel (0) target = $region45
    $region44: #{tpu_custom_call.1} parent=1 // pred_region
      %98 = dma.done [#allocation6], 1024
    $region45: #{tpu_custom_call.1} parent=1 // pred_fallthru
      _
    // Predicated region
    $region46: #{tpu_custom_call.1} parent=1 // pred_check
      _
    $region47: #{tpu_custom_call.1} parent=1 // pred_check_branch
      %100 = sbr.rel (0) target = $region49
    $region48: #{tpu_custom_call.1} parent=1 // pred_region
      %102 = dma.done [#allocation6], 2304
    $region49: #{tpu_custom_call.1} parent=1 // pred_fallthru
      _
    // Predicated region
    $region50: #{tpu_custom_call.1} parent=1 // pred_check
      _
    $region51: #{tpu_custom_call.1} parent=1 // pred_check_branch
      %104 = sbr.rel (0) target = $region53
    $region52: #{tpu_custom_call.1} parent=1 // pred_region
      %106 = dma.done [#allocation9], 9216
    $region53: #{tpu_custom_call.1} parent=1 // pred_fallthru
      _
    // Predicated region
    $region54: #{tpu_custom_call.1} parent=1 // pred_check
      _
    $region55: #{tpu_custom_call.1} parent=1 // pred_check_branch
      %108 = sbr.rel (0) target = $region57
    $region56: #{tpu_custom_call.1} parent=1 // pred_region
      %110 = dma.done [#allocation9], 9216
    $region57: #{tpu_custom_call.1} parent=1 // pred_fallthru
      _
    %v112 = vld [vmem:[#allocation2] sm:$0xf]
    %v113 = vld [vmem:[#allocation2 + $0x4] sm:$0xf]
    %v114 = vld [vmem:[#allocation2 + $0x8] sm:$0xf]
    %v115 = vld [vmem:[#allocation2 + $0xc] sm:$0xf]
    %v116 = vld [vmem:[#allocation2 + $0x10] sm:$0xf]
    %v117 = vld [vmem:[#allocation2 + $0x14] sm:$0xf]
    %v118 = vld [vmem:[#allocation2 + $0x18] sm:$0xf]
    %v119 = vld [vmem:[#allocation2 + $0x1c] sm:$0xf]
    %v120 = vld [vmem:[#allocation2 + $0x20] sm:$0xf]
    %v121 = vld [vmem:[#allocation2 + $0x24] sm:$0xf]
    %v122 = vld [vmem:[#allocation2 + $0x28] sm:$0xf]
    %v123 = vld [vmem:[#allocation2 + $0x2c] sm:$0xf]
    %v124 = vld [vmem:[#allocation2 + $0x30] sm:$0xf]
    %v125 = vld [vmem:[#allocation2 + $0x34] sm:$0xf]
    %v126 = vld [vmem:[#allocation2 + $0x38] sm:$0xf]
    %v127 = vld [vmem:[#allocation2 + $0x3c] sm:$0xf]
    %v128 = vld [vmem:[#allocation5] sm:$0xf]
    %v129 = vld [vmem:[#allocation5 + $0x4] sm:$0xf]
    %v130 = vld [vmem:[#allocation5 + $0x8] sm:$0xf]
    %v131 = vld [vmem:[#allocation5 + $0xc] sm:$0xf]
    %v132 = vld [vmem:[#allocation5 + $0x10] sm:$0xf]
    %v133 = vld [vmem:[#allocation5 + $0x14] sm:$0xf]
    %v134 = vld [vmem:[#allocation5 + $0x18] sm:$0xf]
    %v135 = vld [vmem:[#allocation5 + $0x1c] sm:$0xf]
    %v136 = vld [vmem:[#allocation5 + $0x20] sm:$0xf]
    %v137 = vld [vmem:[#allocation5 + $0x24] sm:$0xf]
    %v138 = vld [vmem:[#allocation5 + $0x28] sm:$0xf]
    %v139 = vld [vmem:[#allocation5 + $0x2c] sm:$0xf]
    %v140 = vld [vmem:[#allocation5 + $0x30] sm:$0xf]
    %v141 = vld [vmem:[#allocation5 + $0x34] sm:$0xf]
    %v142 = vld [vmem:[#allocation5 + $0x38] sm:$0xf]
    %v143 = vld [vmem:[#allocation5 + $0x3c] sm:$0xf]
    %v144 = vld [vmem:[%s2] sm:$0x1]
    %v146 = vperm.slane %v144, 0
    %v164 = vunpack.c.l.b16 %v112
    %v165 = vunpack.c.l.b16 %v113
    %v166 = vunpack.c.l.b16 %v114
    %v167 = vunpack.c.l.b16 %v115
    %v168 = vunpack.c.l.b16 %v116
    %v169 = vunpack.c.l.b16 %v117
    %v170 = vunpack.c.l.b16 %v118
    %v171 = vunpack.c.l.b16 %v119
    %v172 = vunpack.c.l.b16 %v120
    %v173 = vunpack.c.l.b16 %v121
    %v174 = vunpack.c.l.b16 %v122
    %v175 = vunpack.c.l.b16 %v123
    %v176 = vunpack.c.l.b16 %v124
    %v177 = vunpack.c.l.b16 %v125
    %v178 = vunpack.c.l.b16 %v126
    %v179 = vunpack.c.l.b16 %v127
    %v180 = vpack.c.b16 %v165, %v164
    %v181 = vpack.c.b16 %v167, %v166
    %v182 = vpack.c.b16 %v169, %v168
    %v183 = vpack.c.b16 %v171, %v170
    %v184 = vpack.c.b16 %v173, %v172
    %v185 = vpack.c.b16 %v175, %v174
    %v186 = vpack.c.b16 %v177, %v176
    %v187 = vpack.c.b16 %v179, %v178
    %v212 = vunpack.c.l.b16 %v128
    %v213 = vunpack.c.l.b16 %v129
    %v214 = vunpack.c.l.b16 %v130
    %v215 = vunpack.c.l.b16 %v131
    %v216 = vunpack.c.l.b16 %v132
    %v217 = vunpack.c.l.b16 %v133
    %v218 = vunpack.c.l.b16 %v134
    %v219 = vunpack.c.l.b16 %v135
    %v220 = vunpack.c.l.b16 %v136
    %v221 = vunpack.c.l.b16 %v137
    %v222 = vunpack.c.l.b16 %v138
    %v223 = vunpack.c.l.b16 %v139
    %v224 = vunpack.c.l.b16 %v140
    %v225 = vunpack.c.l.b16 %v141
    %v226 = vunpack.c.l.b16 %v142
    %v227 = vunpack.c.l.b16 %v143
    %v228 = vpack.c.b16 %v213, %v212
    %v229 = vpack.c.b16 %v215, %v214
    %v230 = vpack.c.b16 %v217, %v216
    %v231 = vpack.c.b16 %v219, %v218
    %v232 = vpack.c.b16 %v221, %v220
    %v233 = vpack.c.b16 %v223, %v222
    %v234 = vpack.c.b16 %v225, %v224
    %v235 = vpack.c.b16 %v227, %v226
    %244 = vmatpush.bf16.msra.mxu0 %v235
    %245 = vmatpush.bf16.msra.mxu0 %v234
    %246 = vmatpush.bf16.msra.mxu0 %v233
    %247 = vmatpush.bf16.msra.mxu0 %v232
    %248 = vmatpush.bf16.msra.mxu0 %v231
    %249 = vmatpush.bf16.msra.mxu0 %v230
    %250 = vmatpush.bf16.msra.mxu0 %v229
    %251 = vmatpush.bf16.msra.mxu0 %v228
    %252 = vmatmul.bf16.gmra.mxu0 %v180
    %v253 = vpop.f32.mrf.mxu0
    %v254 = vadd.f32 %v146, %v253
    %v255 = vpop.f32.mrf.mxu0
    %v256 = vadd.f32 %v146, %v255
    %257 = vmatmul.bf16.gmra.mxu0 %v181
    %v258 = vpop.f32.mrf.mxu0
    %v259 = vadd.f32 %v146, %v258
    %v260 = vpop.f32.mrf.mxu0
    %v261 = vadd.f32 %v146, %v260
    %262 = vmatmul.bf16.gmra.mxu0 %v182
    %v263 = vpop.f32.mrf.mxu0
    %v264 = vadd.f32 %v146, %v263
    %v265 = vpop.f32.mrf.mxu0
    %v266 = vadd.f32 %v146, %v265
    %267 = vmatmul.bf16.gmra.mxu0 %v183
    %v268 = vpop.f32.mrf.mxu0
    %v269 = vadd.f32 %v146, %v268
    %v270 = vpop.f32.mrf.mxu0
    %v271 = vadd.f32 %v146, %v270
    %272 = vmatmul.bf16.gmra.mxu0 %v184
    %v273 = vpop.f32.mrf.mxu0
    %v274 = vadd.f32 %v146, %v273
    %v275 = vpop.f32.mrf.mxu0
    %v276 = vadd.f32 %v146, %v275
    %277 = vmatmul.bf16.gmra.mxu0 %v185
    %v278 = vpop.f32.mrf.mxu0
    %v279 = vadd.f32 %v146, %v278
    %v280 = vpop.f32.mrf.mxu0
    %v281 = vadd.f32 %v146, %v280
    %282 = vmatmul.bf16.gmra.mxu0 %v186
    %v283 = vpop.f32.mrf.mxu0
    %v284 = vadd.f32 %v146, %v283
    %v285 = vpop.f32.mrf.mxu0
    %v286 = vadd.f32 %v146, %v285
    %287 = vmatmul.bf16.gmra.mxu0 %v187
    %v288 = vpop.f32.mrf.mxu0
    %v289 = vadd.f32 %v146, %v288
    %v290 = vpop.f32.mrf.mxu0
    %v291 = vadd.f32 %v146, %v290
    %292 = vdwg.mxu0
    %v293 = vmax.f32 %v254, 0.0
    %v294 = vmax.f32 %v256, 0.0
    %v295 = vmax.f32 %v259, 0.0
    %v296 = vmax.f32 %v261, 0.0
    %v297 = vmax.f32 %v264, 0.0
    %v298 = vmax.f32 %v266, 0.0
    %v299 = vmax.f32 %v269, 0.0
    %v300 = vmax.f32 %v271, 0.0
    %v301 = vmax.f32 %v274, 0.0
    %v302 = vmax.f32 %v276, 0.0
    %v303 = vmax.f32 %v279, 0.0
    %v304 = vmax.f32 %v281, 0.0
    %v305 = vmax.f32 %v284, 0.0
    %v306 = vmax.f32 %v286, 0.0
    %v307 = vmax.f32 %v289, 0.0
    %v308 = vmax.f32 %v291, 0.0
    %v309 = vpack.c.bf16 %v294, %v293
    %v310 = vpack.c.bf16 %v296, %v295
    %v311 = vpack.c.bf16 %v298, %v297
    %v312 = vpack.c.bf16 %v300, %v299
    %v313 = vpack.c.bf16 %v302, %v301
    %v314 = vpack.c.bf16 %v304, %v303
    %v315 = vpack.c.bf16 %v306, %v305
    %v316 = vpack.c.bf16 %v308, %v307
    %v317 = vld [vmem:[#allocation7] sm:$0xf]
    %v318 = vld [vmem:[#allocation7 + $0x4] sm:$0xf]
    %v319 = vld [vmem:[#allocation7 + $0x8] sm:$0xf]
    %v320 = vld [vmem:[#allocation7 + $0xc] sm:$0xf]
    %v321 = vld [vmem:[#allocation7 + $0x10] sm:$0xf]
    %v322 = vld [vmem:[#allocation7 + $0x14] sm:$0xf]
    %v323 = vld [vmem:[#allocation7 + $0x18] sm:$0xf]
    %v324 = vld [vmem:[#allocation7 + $0x1c] sm:$0xf]
    %v325 = vld [vmem:[#allocation7 + $0x20] sm:$0xf]
    %v326 = vld [vmem:[#allocation7 + $0x24] sm:$0xf]
    %v327 = vld [vmem:[#allocation7 + $0x28] sm:$0xf]
    %v328 = vld [vmem:[#allocation7 + $0x2c] sm:$0xf]
    %v329 = vld [vmem:[#allocation7 + $0x30] sm:$0xf]
    %v330 = vld [vmem:[#allocation7 + $0x34] sm:$0xf]
    %v331 = vld [vmem:[#allocation7 + $0x38] sm:$0xf]
    %v332 = vld [vmem:[#allocation7 + $0x3c] sm:$0xf]
    %v333 = vld [vmem:[#allocation7 + $0x40] sm:$0xf]
    %v334 = vld [vmem:[#allocation7 + $0x44] sm:$0xf]
    %v335 = vld [vmem:[#allocation7 + $0x48] sm:$0xf]
    %v336 = vld [vmem:[#allocation7 + $0x4c] sm:$0xf]
    %v337 = vld [vmem:[#allocation7 + $0x50] sm:$0xf]
    %v338 = vld [vmem:[#allocation7 + $0x54] sm:$0xf]
    %v339 = vld [vmem:[#allocation7 + $0x58] sm:$0xf]
    %v340 = vld [vmem:[#allocation7 + $0x5c] sm:$0xf]
    %v341 = vld [vmem:[#allocation7 + $0x60] sm:$0xf]
    %v342 = vld [vmem:[#allocation7 + $0x64] sm:$0xf]
    %v343 = vld [vmem:[#allocation7 + $0x68] sm:$0xf]
    %v344 = vld [vmem:[#allocation7 + $0x6c] sm:$0xf]
    %v345 = vld [vmem:[#allocation7 + $0x70] sm:$0xf]
    %v346 = vld [vmem:[#allocation7 + $0x74] sm:$0xf]
    %v347 = vld [vmem:[#allocation7 + $0x78] sm:$0xf]
    %v348 = vld [vmem:[#allocation7 + $0x7c] sm:$0xf]
    %v349 = vld [vmem:[#allocation7 + $0x80] sm:$0xf]
    %v350 = vld [vmem:[#allocation7 + $0x84] sm:$0xf]
    %v351 = vld [vmem:[#allocation7 + $0x88] sm:$0xf]
    %v352 = vld [vmem:[#allocation7 + $0x8c] sm:$0xf]
    %v389 = vunpack.c.l.b16 %v317
    %v390 = vunpack.c.l.b16 %v318
    %v391 = vunpack.c.l.b16 %v319
    %v392 = vunpack.c.l.b16 %v320
    %v393 = vunpack.c.l.b16 %v321
    %v394 = vunpack.c.l.b16 %v322
    %v395 = vunpack.c.l.b16 %v323
    %v396 = vunpack.c.l.b16 %v324
    %v397 = vunpack.c.l.b16 %v325
    %v398 = vunpack.c.l.b16 %v326
    %v399 = vunpack.c.l.b16 %v327
    %v400 = vunpack.c.l.b16 %v328
    %v401 = vunpack.c.l.b16 %v329
    %v402 = vunpack.c.l.b16 %v330
    %v403 = vunpack.c.l.b16 %v331
    %v404 = vunpack.c.l.b16 %v332
    %v405 = vunpack.c.l.b16 %v333
    %v406 = vunpack.c.l.b16 %v334
    %v407 = vunpack.c.l.b16 %v335
    %v408 = vunpack.c.l.b16 %v336
    %v409 = vunpack.c.l.b16 %v337
    %v410 = vunpack.c.l.b16 %v338
    %v411 = vunpack.c.l.b16 %v339
    %v412 = vunpack.c.l.b16 %v340
    %v413 = vunpack.c.l.b16 %v341
    %v414 = vunpack.c.l.b16 %v342
    %v415 = vunpack.c.l.b16 %v343
    %v416 = vunpack.c.l.b16 %v344
    %v417 = vunpack.c.l.b16 %v345
    %v418 = vunpack.c.l.b16 %v346
    %v419 = vunpack.c.l.b16 %v347
    %v420 = vunpack.c.l.b16 %v348
    %v421 = vunpack.c.l.b16 %v349
    %v422 = vunpack.c.l.b16 %v350
    %v423 = vunpack.c.l.b16 %v351
    %v424 = vunpack.c.l.b16 %v352
    %v425 = vpack.c.b16 %v390, %v389
    %v426 = vpack.c.b16 %v392, %v391
    %v427 = vpack.c.b16 %v394, %v393
    %v428 = vpack.c.b16 %v396, %v395
    %v429 = vpack.c.b16 %v398, %v397
    %v430 = vpack.c.b16 %v400, %v399
    %v431 = vpack.c.b16 %v402, %v401
    %v432 = vpack.c.b16 %v404, %v403
    %v433 = vpack.c.b16 %v406, %v405
    %v434 = vpack.c.b16 %v408, %v407
    %v435 = vpack.c.b16 %v410, %v409
    %v436 = vpack.c.b16 %v412, %v411
    %v437 = vpack.c.b16 %v414, %v413
    %v438 = vpack.c.b16 %v416, %v415
    %v439 = vpack.c.b16 %v418, %v417
    %v440 = vpack.c.b16 %v420, %v419
    %v441 = vpack.c.b16 %v422, %v421
    %v442 = vpack.c.b16 %v424, %v423
    %461 = vmatpush.bf16.msra.mxu0 %v316
    %462 = vmatpush.bf16.msra.mxu0 %v315
    %463 = vmatpush.bf16.msra.mxu0 %v314
    %464 = vmatpush.bf16.msra.mxu0 %v313
    %465 = vmatpush.bf16.msra.mxu0 %v312
    %466 = vmatpush.bf16.msra.mxu0 %v311
    %467 = vmatpush.bf16.msra.mxu0 %v310
    %468 = vmatpush.bf16.msra.mxu0 %v309
    %469 = vmatmul.bf16.gmra.mxu0 %v425
    %v470 = vpop.f32.mrf.mxu0
    %v471 = vadd.f32 0.0, %v470
    %v472 = vpop.f32.mrf.mxu0
    %v473 = vadd.f32 0.0, %v472
    %474 = vmatmul.bf16.gmra.mxu0 %v426
    %v475 = vpop.f32.mrf.mxu0
    %v476 = vadd.f32 0.0, %v475
    %v477 = vpop.f32.mrf.mxu0
    %v478 = vadd.f32 0.0, %v477
    %479 = vmatmul.bf16.gmra.mxu0 %v427
    %v480 = vpop.f32.mrf.mxu0
    %v481 = vadd.f32 0.0, %v480
    %v482 = vpop.f32.mrf.mxu0
    %v483 = vadd.f32 0.0, %v482
    %484 = vmatmul.bf16.gmra.mxu0 %v428
    %v485 = vpop.f32.mrf.mxu0
    %v486 = vadd.f32 0.0, %v485
    %v487 = vpop.f32.mrf.mxu0
    %v488 = vadd.f32 0.0, %v487
    %489 = vmatmul.bf16.gmra.mxu0 %v429
    %v490 = vpop.f32.mrf.mxu0
    %v491 = vadd.f32 0.0, %v490
    %v492 = vpop.f32.mrf.mxu0
    %v493 = vadd.f32 0.0, %v492
    %494 = vmatmul.bf16.gmra.mxu0 %v430
    %v495 = vpop.f32.mrf.mxu0
    %v496 = vadd.f32 0.0, %v495
    %v497 = vpop.f32.mrf.mxu0
    %v498 = vadd.f32 0.0, %v497
    %499 = vmatmul.bf16.gmra.mxu0 %v431
    %v500 = vpop.f32.mrf.mxu0
    %v501 = vadd.f32 0.0, %v500
    %v502 = vpop.f32.mrf.mxu0
    %v503 = vadd.f32 0.0, %v502
    %504 = vmatmul.bf16.gmra.mxu0 %v432
    %v505 = vpop.f32.mrf.mxu0
    %v506 = vadd.f32 0.0, %v505
    %v507 = vpop.f32.mrf.mxu0
    %v508 = vadd.f32 0.0, %v507
    %509 = vmatmul.bf16.gmra.mxu0 %v433
    %v510 = vpop.f32.mrf.mxu0
    %v511 = vadd.f32 0.0, %v510
    %v512 = vpop.f32.mrf.mxu0
    %v513 = vadd.f32 0.0, %v512
    %514 = vmatmul.bf16.gmra.mxu0 %v434
    %v515 = vpop.f32.mrf.mxu0
    %v516 = vadd.f32 0.0, %v515
    %v517 = vpop.f32.mrf.mxu0
    %v518 = vadd.f32 0.0, %v517
    %519 = vmatmul.bf16.gmra.mxu0 %v435
    %v520 = vpop.f32.mrf.mxu0
    %v521 = vadd.f32 0.0, %v520
    %v522 = vpop.f32.mrf.mxu0
    %v523 = vadd.f32 0.0, %v522
    %524 = vmatmul.bf16.gmra.mxu0 %v436
    %v525 = vpop.f32.mrf.mxu0
    %v526 = vadd.f32 0.0, %v525
    %v527 = vpop.f32.mrf.mxu0
    %v528 = vadd.f32 0.0, %v527
    %529 = vmatmul.bf16.gmra.mxu0 %v437
    %v530 = vpop.f32.mrf.mxu0
    %v531 = vadd.f32 0.0, %v530
    %v532 = vpop.f32.mrf.mxu0
    %v533 = vadd.f32 0.0, %v532
    %534 = vmatmul.bf16.gmra.mxu0 %v438
    %v535 = vpop.f32.mrf.mxu0
    %v536 = vadd.f32 0.0, %v535
    %v537 = vpop.f32.mrf.mxu0
    %v538 = vadd.f32 0.0, %v537
    %539 = vmatmul.bf16.gmra.mxu0 %v439
    %v540 = vpop.f32.mrf.mxu0
    %v541 = vadd.f32 0.0, %v540
    %v542 = vpop.f32.mrf.mxu0
    %v543 = vadd.f32 0.0, %v542
    %544 = vmatmul.bf16.gmra.mxu0 %v440
    %v545 = vpop.f32.mrf.mxu0
    %v546 = vadd.f32 0.0, %v545
    %v547 = vpop.f32.mrf.mxu0
    %v548 = vadd.f32 0.0, %v547
    %549 = vmatmul.bf16.gmra.mxu0 %v441
    %v550 = vpop.f32.mrf.mxu0
    %v551 = vadd.f32 0.0, %v550
    %v552 = vpop.f32.mrf.mxu0
    %v553 = vadd.f32 0.0, %v552
    %554 = vmatmul.bf16.gmra.mxu0 %v442
    %v555 = vpop.f32.mrf.mxu0
    %v556 = vadd.f32 0.0, %v555
    %v557 = vpop.f32.mrf.mxu0
    %v558 = vadd.f32 0.0, %v557
    %559 = vdwg.mxu0
    %v560 = vpack.c.bf16 %v471, %v471
    %v561 = vpack.c.bf16 %v473, %v473
    %v562 = vpack.c.bf16 %v476, %v476
    %v563 = vpack.c.bf16 %v478, %v478
    %v564 = vpack.c.bf16 %v481, %v481
    %v565 = vpack.c.bf16 %v483, %v483
    %v566 = vpack.c.bf16 %v486, %v486
    %v567 = vpack.c.bf16 %v488, %v488
    %v568 = vpack.c.bf16 %v491, %v491
    %v569 = vpack.c.bf16 %v493, %v493
    %v570 = vpack.c.bf16 %v496, %v496
    %v571 = vpack.c.bf16 %v498, %v498
    %v572 = vpack.c.bf16 %v501, %v501
    %v573 = vpack.c.bf16 %v503, %v503
    %v574 = vpack.c.bf16 %v506, %v506
    %v575 = vpack.c.bf16 %v508, %v508
    %v576 = vpack.c.bf16 %v511, %v511
    %v577 = vpack.c.bf16 %v513, %v513
    %v578 = vpack.c.bf16 %v516, %v516
    %v579 = vpack.c.bf16 %v518, %v518
    %v580 = vpack.c.bf16 %v521, %v521
    %v581 = vpack.c.bf16 %v523, %v523
    %v582 = vpack.c.bf16 %v526, %v526
    %v583 = vpack.c.bf16 %v528, %v528
    %v584 = vpack.c.bf16 %v531, %v531
    %v585 = vpack.c.bf16 %v533, %v533
    %v586 = vpack.c.bf16 %v536, %v536
    %v587 = vpack.c.bf16 %v538, %v538
    %v588 = vpack.c.bf16 %v541, %v541
    %v589 = vpack.c.bf16 %v543, %v543
    %v590 = vpack.c.bf16 %v546, %v546
    %v591 = vpack.c.bf16 %v548, %v548
    %v592 = vpack.c.bf16 %v551, %v551
    %v593 = vpack.c.bf16 %v553, %v553
    %v594 = vpack.c.bf16 %v556, %v556
    %v595 = vpack.c.bf16 %v558, %v558
    %v596 = vld [vmem:[#allocation8] sm:$0xf]
    %v597 = vld [vmem:[#allocation8 + $0x4] sm:$0xf]
    %v598 = vld [vmem:[#allocation8 + $0x8] sm:$0xf]
    %v599 = vld [vmem:[#allocation8 + $0xc] sm:$0xf]
    %v600 = vld [vmem:[#allocation8 + $0x10] sm:$0xf]
    %v601 = vld [vmem:[#allocation8 + $0x14] sm:$0xf]
    %v602 = vld [vmem:[#allocation8 + $0x18] sm:$0xf]
    %v603 = vld [vmem:[#allocation8 + $0x1c] sm:$0xf]
    %v604 = vld [vmem:[#allocation8 + $0x20] sm:$0xf]
    %v605 = vld [vmem:[#allocation8 + $0x24] sm:$0xf]
    %v606 = vld [vmem:[#allocation8 + $0x28] sm:$0xf]
    %v607 = vld [vmem:[#allocation8 + $0x2c] sm:$0xf]
    %v608 = vld [vmem:[#allocation8 + $0x30] sm:$0xf]
    %v609 = vld [vmem:[#allocation8 + $0x34] sm:$0xf]
    %v610 = vld [vmem:[#allocation8 + $0x38] sm:$0xf]
    %v611 = vld [vmem:[#allocation8 + $0x3c] sm:$0xf]
    %s612 = scalar_lea.vmem [#allocation8], 64
    %v613 = vld [vmem:[%s612] sm:$0xf]
    %v614 = vld [vmem:[%s612 + $0x4] sm:$0xf]
    %v615 = vld [vmem:[%s612 + $0x8] sm:$0xf]
    %v616 = vld [vmem:[%s612 + $0xc] sm:$0xf]
    %v617 = vld [vmem:[%s612 + $0x10] sm:$0xf]
    %v618 = vld [vmem:[%s612 + $0x14] sm:$0xf]
    %v619 = vld [vmem:[%s612 + $0x18] sm:$0xf]
    %v620 = vld [vmem:[%s612 + $0x1c] sm:$0xf]
    %v621 = vld [vmem:[%s612 + $0x20] sm:$0xf]
    %v622 = vld [vmem:[%s612 + $0x24] sm:$0xf]
    %v623 = vld [vmem:[%s612 + $0x28] sm:$0xf]
    %v624 = vld [vmem:[%s612 + $0x2c] sm:$0xf]
    %v625 = vld [vmem:[%s612 + $0x30] sm:$0xf]
    %v626 = vld [vmem:[%s612 + $0x34] sm:$0xf]
    %v627 = vld [vmem:[%s612 + $0x38] sm:$0xf]
    %v628 = vld [vmem:[%s612 + $0x3c] sm:$0xf]
    %v633 = vunpack.c.l.b16 %v564
    %v634 = vunpack.c.l.b16 %v565
    %v635 = vunpack.c.l.b16 %v566
    %v636 = vunpack.c.l.b16 %v567
    %v637 = vpack.c.b16 %v634, %v633
    %v638 = vpack.c.b16 %v636, %v635
    %v657 = vunpack.c.l.b16 %v613
    %v658 = vunpack.c.l.b16 %v614
    %v659 = vunpack.c.l.b16 %v615
    %v660 = vunpack.c.l.b16 %v616
    %v661 = vunpack.c.l.b16 %v617
    %v662 = vunpack.c.l.b16 %v618
    %v663 = vunpack.c.l.b16 %v619
    %v664 = vunpack.c.l.b16 %v620
    %v665 = vunpack.c.l.b16 %v621
    %v666 = vunpack.c.l.b16 %v622
    %v667 = vunpack.c.l.b16 %v623
    %v668 = vunpack.c.l.b16 %v624
    %v669 = vunpack.c.l.b16 %v625
    %v670 = vunpack.c.l.b16 %v626
    %v671 = vunpack.c.l.b16 %v627
    %v672 = vunpack.c.l.b16 %v628
    %v673 = vpack.c.b16 %v658, %v657
    %v674 = vpack.c.b16 %v660, %v659
    %v675 = vpack.c.b16 %v662, %v661
    %v676 = vpack.c.b16 %v664, %v663
    %v677 = vpack.c.b16 %v666, %v665
    %v678 = vpack.c.b16 %v668, %v667
    %v679 = vpack.c.b16 %v670, %v669
    %v680 = vpack.c.b16 %v672, %v671
    %689 = vmatpush.bf16.msra.mxu0 %v680
    %690 = vmatpush.bf16.msra.mxu0 %v679
    %691 = vmatpush.bf16.msra.mxu0 %v678
    %692 = vmatpush.bf16.msra.mxu0 %v677
    %693 = vmatpush.bf16.msra.mxu0 %v676
    %694 = vmatpush.bf16.msra.mxu0 %v675
    %695 = vmatpush.bf16.msra.mxu0 %v674
    %696 = vmatpush.bf16.msra.mxu0 %v673
    %697 = vmatmul.bf16.gmra.mxu0 %v637
    %v698 = vpop.f32.mrf.mxu0
    %v699 = vadd.f32 0.0, %v698
    %v700 = vpop.f32.mrf.mxu0
    %v701 = vadd.f32 0.0, %v700
    %702 = vmatmul.bf16.gmra.mxu0 %v638
    %v703 = vpop.f32.mrf.mxu0
    %v704 = vadd.f32 0.0, %v703
    %v705 = vpop.f32.mrf.mxu0
    %v706 = vadd.f32 0.0, %v705
    %707 = vdwg.mxu0
    %v712 = vunpack.c.l.b16 %v560
    %v713 = vunpack.c.l.b16 %v561
    %v714 = vunpack.c.l.b16 %v562
    %v715 = vunpack.c.l.b16 %v563
    %v716 = vpack.c.b16 %v713, %v712
    %v717 = vpack.c.b16 %v715, %v714
    %v736 = vunpack.c.l.b16 %v596
    %v737 = vunpack.c.l.b16 %v597
    %v738 = vunpack.c.l.b16 %v598
    %v739 = vunpack.c.l.b16 %v599
    %v740 = vunpack.c.l.b16 %v600
    %v741 = vunpack.c.l.b16 %v601
    %v742 = vunpack.c.l.b16 %v602
    %v743 = vunpack.c.l.b16 %v603
    %v744 = vunpack.c.l.b16 %v604
    %v745 = vunpack.c.l.b16 %v605
    %v746 = vunpack.c.l.b16 %v606
    %v747 = vunpack.c.l.b16 %v607
    %v748 = vunpack.c.l.b16 %v608
    %v749 = vunpack.c.l.b16 %v609
    %v750 = vunpack.c.l.b16 %v610
    %v751 = vunpack.c.l.b16 %v611
    %v752 = vpack.c.b16 %v737, %v736
    %v753 = vpack.c.b16 %v739, %v738
    %v754 = vpack.c.b16 %v741, %v740
    %v755 = vpack.c.b16 %v743, %v742
    %v756 = vpack.c.b16 %v745, %v744
    %v757 = vpack.c.b16 %v747, %v746
    %v758 = vpack.c.b16 %v749, %v748
    %v759 = vpack.c.b16 %v751, %v750
    %768 = vmatpush.bf16.msra.mxu0 %v759
    %769 = vmatpush.bf16.msra.mxu0 %v758
    %770 = vmatpush.bf16.msra.mxu0 %v757
    %771 = vmatpush.bf16.msra.mxu0 %v756
    %772 = vmatpush.bf16.msra.mxu0 %v755
    %773 = vmatpush.bf16.msra.mxu0 %v754
    %774 = vmatpush.bf16.msra.mxu0 %v753
    %775 = vmatpush.bf16.msra.mxu0 %v752
    %776 = vmatmul.bf16.gmra.mxu0 %v716
    %v777 = vpop.f32.mrf.mxu0
    %v778 = vadd.f32 %v699, %v777
    %v779 = vpop.f32.mrf.mxu0
    %v780 = vadd.f32 %v701, %v779
    %781 = vmatmul.bf16.gmra.mxu0 %v717
    %v782 = vpop.f32.mrf.mxu0
    %v783 = vadd.f32 %v704, %v782
    %v784 = vpop.f32.mrf.mxu0
    %v785 = vadd.f32 %v706, %v784
    %786 = vdwg.mxu0
    %s787 = scalar_lea.vmem [#allocation8], 128
    %v788 = vld [vmem:[%s787] sm:$0xf]
    %v789 = vld [vmem:[%s787 + $0x4] sm:$0xf]
    %v790 = vld [vmem:[%s787 + $0x8] sm:$0xf]
    %v791 = vld [vmem:[%s787 + $0xc] sm:$0xf]
    %v792 = vld [vmem:[%s787 + $0x10] sm:$0xf]
    %v793 = vld [vmem:[%s787 + $0x14] sm:$0xf]
    %v794 = vld [vmem:[%s787 + $0x18] sm:$0xf]
    %v795 = vld [vmem:[%s787 + $0x1c] sm:$0xf]
    %v796 = vld [vmem:[%s787 + $0x20] sm:$0xf]
    %v797 = vld [vmem:[%s787 + $0x24] sm:$0xf]
    %v798 = vld [vmem:[%s787 + $0x28] sm:$0xf]
    %v799 = vld [vmem:[%s787 + $0x2c] sm:$0xf]
    %v800 = vld [vmem:[%s787 + $0x30] sm:$0xf]
    %v801 = vld [vmem:[%s787 + $0x34] sm:$0xf]
    %v802 = vld [vmem:[%s787 + $0x38] sm:$0xf]
    %v803 = vld [vmem:[%s787 + $0x3c] sm:$0xf]
    %v808 = vunpack.c.l.b16 %v568
    %v809 = vunpack.c.l.b16 %v569
    %v810 = vunpack.c.l.b16 %v570
    %v811 = vunpack.c.l.b16 %v571
    %v812 = vpack.c.b16 %v809, %v808
    %v813 = vpack.c.b16 %v811, %v810
    %v832 = vunpack.c.l.b16 %v788
    %v833 = vunpack.c.l.b16 %v789
    %v834 = vunpack.c.l.b16 %v790
    %v835 = vunpack.c.l.b16 %v791
    %v836 = vunpack.c.l.b16 %v792
    %v837 = vunpack.c.l.b16 %v793
    %v838 = vunpack.c.l.b16 %v794
    %v839 = vunpack.c.l.b16 %v795
    %v840 = vunpack.c.l.b16 %v796
    %v841 = vunpack.c.l.b16 %v797
    %v842 = vunpack.c.l.b16 %v798
    %v843 = vunpack.c.l.b16 %v799
    %v844 = vunpack.c.l.b16 %v800
    %v845 = vunpack.c.l.b16 %v801
    %v846 = vunpack.c.l.b16 %v802
    %v847 = vunpack.c.l.b16 %v803
    %v848 = vpack.c.b16 %v833, %v832
    %v849 = vpack.c.b16 %v835, %v834
    %v850 = vpack.c.b16 %v837, %v836
    %v851 = vpack.c.b16 %v839, %v838
    %v852 = vpack.c.b16 %v841, %v840
    %v853 = vpack.c.b16 %v843, %v842
    %v854 = vpack.c.b16 %v845, %v844
    %v855 = vpack.c.b16 %v847, %v846
    %864 = vmatpush.bf16.msra.mxu0 %v855
    %865 = vmatpush.bf16.msra.mxu0 %v854
    %866 = vmatpush.bf16.msra.mxu0 %v853
    %867 = vmatpush.bf16.msra.mxu0 %v852
    %868 = vmatpush.bf16.msra.mxu0 %v851
    %869 = vmatpush.bf16.msra.mxu0 %v850
    %870 = vmatpush.bf16.msra.mxu0 %v849
    %871 = vmatpush.bf16.msra.mxu0 %v848
    %872 = vmatmul.bf16.gmra.mxu0 %v812
    %v873 = vpop.f32.mrf.mxu0
    %v874 = vadd.f32 0.0, %v873
    %v875 = vpop.f32.mrf.mxu0
    %v876 = vadd.f32 0.0, %v875
    %877 = vmatmul.bf16.gmra.mxu0 %v813
    %v878 = vpop.f32.mrf.mxu0
    %v879 = vadd.f32 0.0, %v878
    %v880 = vpop.f32.mrf.mxu0
    %v881 = vadd.f32 0.0, %v880
    %882 = vdwg.mxu0
    %v883 = vadd.f32 %v778, %v874
    %v884 = vadd.f32 %v780, %v876
    %v885 = vadd.f32 %v783, %v879
    %v886 = vadd.f32 %v785, %v881
    %s887 = scalar_lea.vmem [#allocation8], 192
    %v888 = vld [vmem:[%s887] sm:$0xf]
    %v889 = vld [vmem:[%s887 + $0x4] sm:$0xf]
    %v890 = vld [vmem:[%s887 + $0x8] sm:$0xf]
    %v891 = vld [vmem:[%s887 + $0xc] sm:$0xf]
    %v892 = vld [vmem:[%s887 + $0x10] sm:$0xf]
    %v893 = vld [vmem:[%s887 + $0x14] sm:$0xf]
    %v894 = vld [vmem:[%s887 + $0x18] sm:$0xf]
    %v895 = vld [vmem:[%s887 + $0x1c] sm:$0xf]
    %v896 = vld [vmem:[%s887 + $0x20] sm:$0xf]
    %v897 = vld [vmem:[%s887 + $0x24] sm:$0xf]
    %v898 = vld [vmem:[%s887 + $0x28] sm:$0xf]
    %v899 = vld [vmem:[%s887 + $0x2c] sm:$0xf]
    %v900 = vld [vmem:[%s887 + $0x30] sm:$0xf]
    %v901 = vld [vmem:[%s887 + $0x34] sm:$0xf]
    %v902 = vld [vmem:[%s887 + $0x38] sm:$0xf]
    %v903 = vld [vmem:[%s887 + $0x3c] sm:$0xf]
    %v908 = vunpack.c.l.b16 %v572
    %v909 = vunpack.c.l.b16 %v573
    %v910 = vunpack.c.l.b16 %v574
    %v911 = vunpack.c.l.b16 %v575
    %v912 = vpack.c.b16 %v909, %v908
    %v913 = vpack.c.b16 %v911, %v910
    %v932 = vunpack.c.l.b16 %v888
    %v933 = vunpack.c.l.b16 %v889
    %v934 = vunpack.c.l.b16 %v890
    %v935 = vunpack.c.l.b16 %v891
    %v936 = vunpack.c.l.b16 %v892
    %v937 = vunpack.c.l.b16 %v893
    %v938 = vunpack.c.l.b16 %v894
    %v939 = vunpack.c.l.b16 %v895
    %v940 = vunpack.c.l.b16 %v896
    %v941 = vunpack.c.l.b16 %v897
    %v942 = vunpack.c.l.b16 %v898
    %v943 = vunpack.c.l.b16 %v899
    %v944 = vunpack.c.l.b16 %v900
    %v945 = vunpack.c.l.b16 %v901
    %v946 = vunpack.c.l.b16 %v902
    %v947 = vunpack.c.l.b16 %v903
    %v948 = vpack.c.b16 %v933, %v932
    %v949 = vpack.c.b16 %v935, %v934
    %v950 = vpack.c.b16 %v937, %v936
    %v951 = vpack.c.b16 %v939, %v938
    %v952 = vpack.c.b16 %v941, %v940
    %v953 = vpack.c.b16 %v943, %v942
    %v954 = vpack.c.b16 %v945, %v944
    %v955 = vpack.c.b16 %v947, %v946
    %964 = vmatpush.bf16.msra.mxu0 %v955
    %965 = vmatpush.bf16.msra.mxu0 %v954
    %966 = vmatpush.bf16.msra.mxu0 %v953
    %967 = vmatpush.bf16.msra.mxu0 %v952
    %968 = vmatpush.bf16.msra.mxu0 %v951
    %969 = vmatpush.bf16.msra.mxu0 %v950
    %970 = vmatpush.bf16.msra.mxu0 %v949
    %971 = vmatpush.bf16.msra.mxu0 %v948
    %972 = vmatmul.bf16.gmra.mxu0 %v912
    %v973 = vpop.f32.mrf.mxu0
    %v974 = vadd.f32 0.0, %v973
    %v975 = vpop.f32.mrf.mxu0
    %v976 = vadd.f32 0.0, %v975
    %977 = vmatmul.bf16.gmra.mxu0 %v913
    %v978 = vpop.f32.mrf.mxu0
    %v979 = vadd.f32 0.0, %v978
    %v980 = vpop.f32.mrf.mxu0
    %v981 = vadd.f32 0.0, %v980
    %982 = vdwg.mxu0
    %v983 = vadd.f32 %v883, %v974
    %v984 = vadd.f32 %v884, %v976
    %v985 = vadd.f32 %v885, %v979
    %v986 = vadd.f32 %v886, %v981
    %s987 = scalar_lea.vmem [#allocation8], 256
    %v988 = vld [vmem:[%s987] sm:$0xf]
    %v989 = vld [vmem:[%s987 + $0x4] sm:$0xf]
    %v990 = vld [vmem:[%s987 + $0x8] sm:$0xf]
    %v991 = vld [vmem:[%s987 + $0xc] sm:$0xf]
    %v992 = vld [vmem:[%s987 + $0x10] sm:$0xf]
    %v993 = vld [vmem:[%s987 + $0x14] sm:$0xf]
    %v994 = vld [vmem:[%s987 + $0x18] sm:$0xf]
    %v995 = vld [vmem:[%s987 + $0x1c] sm:$0xf]
    %v996 = vld [vmem:[%s987 + $0x20] sm:$0xf]
    %v997 = vld [vmem:[%s987 + $0x24] sm:$0xf]
    %v998 = vld [vmem:[%s987 + $0x28] sm:$0xf]
    %v999 = vld [vmem:[%s987 + $0x2c] sm:$0xf]
    %v1000 = vld [vmem:[%s987 + $0x30] sm:$0xf]
    %v1001 = vld [vmem:[%s987 + $0x34] sm:$0xf]
    %v1002 = vld [vmem:[%s987 + $0x38] sm:$0xf]
    %v1003 = vld [vmem:[%s987 + $0x3c] sm:$0xf]
    %v1008 = vunpack.c.l.b16 %v576
    %v1009 = vunpack.c.l.b16 %v577
    %v1010 = vunpack.c.l.b16 %v578
    %v1011 = vunpack.c.l.b16 %v579
    %v1012 = vpack.c.b16 %v1009, %v1008
    %v1013 = vpack.c.b16 %v1011, %v1010
    %v1032 = vunpack.c.l.b16 %v988
    %v1033 = vunpack.c.l.b16 %v989
    %v1034 = vunpack.c.l.b16 %v990
    %v1035 = vunpack.c.l.b16 %v991
    %v1036 = vunpack.c.l.b16 %v992
    %v1037 = vunpack.c.l.b16 %v993
    %v1038 = vunpack.c.l.b16 %v994
    %v1039 = vunpack.c.l.b16 %v995
    %v1040 = vunpack.c.l.b16 %v996
    %v1041 = vunpack.c.l.b16 %v997
    %v1042 = vunpack.c.l.b16 %v998
    %v1043 = vunpack.c.l.b16 %v999
    %v1044 = vunpack.c.l.b16 %v1000
    %v1045 = vunpack.c.l.b16 %v1001
    %v1046 = vunpack.c.l.b16 %v1002
    %v1047 = vunpack.c.l.b16 %v1003
    %v1048 = vpack.c.b16 %v1033, %v1032
    %v1049 = vpack.c.b16 %v1035, %v1034
    %v1050 = vpack.c.b16 %v1037, %v1036
    %v1051 = vpack.c.b16 %v1039, %v1038
    %v1052 = vpack.c.b16 %v1041, %v1040
    %v1053 = vpack.c.b16 %v1043, %v1042
    %v1054 = vpack.c.b16 %v1045, %v1044
    %v1055 = vpack.c.b16 %v1047, %v1046
    %1064 = vmatpush.bf16.msra.mxu0 %v1055
    %1065 = vmatpush.bf16.msra.mxu0 %v1054
    %1066 = vmatpush.bf16.msra.mxu0 %v1053
    %1067 = vmatpush.bf16.msra.mxu0 %v1052
    %1068 = vmatpush.bf16.msra.mxu0 %v1051
    %1069 = vmatpush.bf16.msra.mxu0 %v1050
    %1070 = vmatpush.bf16.msra.mxu0 %v1049
    %1071 = vmatpush.bf16.msra.mxu0 %v1048
    %1072 = vmatmul.bf16.gmra.mxu0 %v1012
    %v1073 = vpop.f32.mrf.mxu0
    %v1074 = vadd.f32 0.0, %v1073
    %v1075 = vpop.f32.mrf.mxu0
    %v1076 = vadd.f32 0.0, %v1075
    %1077 = vmatmul.bf16.gmra.mxu0 %v1013
    %v1078 = vpop.f32.mrf.mxu0
    %v1079 = vadd.f32 0.0, %v1078
    %v1080 = vpop.f32.mrf.mxu0
    %v1081 = vadd.f32 0.0, %v1080
    %1082 = vdwg.mxu0
    %v1083 = vadd.f32 %v983, %v1074
    %v1084 = vadd.f32 %v984, %v1076
    %v1085 = vadd.f32 %v985, %v1079
    %v1086 = vadd.f32 %v986, %v1081
    %s1087 = scalar_lea.vmem [#allocation8], 320
    %v1088 = vld [vmem:[%s1087] sm:$0xf]
    %v1089 = vld [vmem:[%s1087 + $0x4] sm:$0xf]
    %v1090 = vld [vmem:[%s1087 + $0x8] sm:$0xf]
    %v1091 = vld [vmem:[%s1087 + $0xc] sm:$0xf]
    %v1092 = vld [vmem:[%s1087 + $0x10] sm:$0xf]
    %v1093 = vld [vmem:[%s1087 + $0x14] sm:$0xf]
    %v1094 = vld [vmem:[%s1087 + $0x18] sm:$0xf]
    %v1095 = vld [vmem:[%s1087 + $0x1c] sm:$0xf]
    %v1096 = vld [vmem:[%s1087 + $0x20] sm:$0xf]
    %v1097 = vld [vmem:[%s1087 + $0x24] sm:$0xf]
    %v1098 = vld [vmem:[%s1087 + $0x28] sm:$0xf]
    %v1099 = vld [vmem:[%s1087 + $0x2c] sm:$0xf]
    %v1100 = vld [vmem:[%s1087 + $0x30] sm:$0xf]
    %v1101 = vld [vmem:[%s1087 + $0x34] sm:$0xf]
    %v1102 = vld [vmem:[%s1087 + $0x38] sm:$0xf]
    %v1103 = vld [vmem:[%s1087 + $0x3c] sm:$0xf]
    %v1108 = vunpack.c.l.b16 %v580
    %v1109 = vunpack.c.l.b16 %v581
    %v1110 = vunpack.c.l.b16 %v582
    %v1111 = vunpack.c.l.b16 %v583
    %v1112 = vpack.c.b16 %v1109, %v1108
    %v1113 = vpack.c.b16 %v1111, %v1110
    %v1132 = vunpack.c.l.b16 %v1088
    %v1133 = vunpack.c.l.b16 %v1089
    %v1134 = vunpack.c.l.b16 %v1090
    %v1135 = vunpack.c.l.b16 %v1091
    %v1136 = vunpack.c.l.b16 %v1092
    %v1137 = vunpack.c.l.b16 %v1093
    %v1138 = vunpack.c.l.b16 %v1094
    %v1139 = vunpack.c.l.b16 %v1095
    %v1140 = vunpack.c.l.b16 %v1096
    %v1141 = vunpack.c.l.b16 %v1097
    %v1142 = vunpack.c.l.b16 %v1098
    %v1143 = vunpack.c.l.b16 %v1099
    %v1144 = vunpack.c.l.b16 %v1100
    %v1145 = vunpack.c.l.b16 %v1101
    %v1146 = vunpack.c.l.b16 %v1102
    %v1147 = vunpack.c.l.b16 %v1103
    %v1148 = vpack.c.b16 %v1133, %v1132
    %v1149 = vpack.c.b16 %v1135, %v1134
    %v1150 = vpack.c.b16 %v1137, %v1136
    %v1151 = vpack.c.b16 %v1139, %v1138
    %v1152 = vpack.c.b16 %v1141, %v1140
    %v1153 = vpack.c.b16 %v1143, %v1142
    %v1154 = vpack.c.b16 %v1145, %v1144
    %v1155 = vpack.c.b16 %v1147, %v1146
    %1164 = vmatpush.bf16.msra.mxu0 %v1155
    %1165 = vmatpush.bf16.msra.mxu0 %v1154
    %1166 = vmatpush.bf16.msra.mxu0 %v1153
    %1167 = vmatpush.bf16.msra.mxu0 %v1152
    %1168 = vmatpush.bf16.msra.mxu0 %v1151
    %1169 = vmatpush.bf16.msra.mxu0 %v1150
    %1170 = vmatpush.bf16.msra.mxu0 %v1149
    %1171 = vmatpush.bf16.msra.mxu0 %v1148
    %1172 = vmatmul.bf16.gmra.mxu0 %v1112
    %v1173 = vpop.f32.mrf.mxu0
    %v1174 = vadd.f32 0.0, %v1173
    %v1175 = vpop.f32.mrf.mxu0
    %v1176 = vadd.f32 0.0, %v1175
    %1177 = vmatmul.bf16.gmra.mxu0 %v1113
    %v1178 = vpop.f32.mrf.mxu0
    %v1179 = vadd.f32 0.0, %v1178
    %v1180 = vpop.f32.mrf.mxu0
    %v1181 = vadd.f32 0.0, %v1180
    %1182 = vdwg.mxu0
    %v1183 = vadd.f32 %v1083, %v1174
    %v1184 = vadd.f32 %v1084, %v1176
    %v1185 = vadd.f32 %v1085, %v1179
    %v1186 = vadd.f32 %v1086, %v1181
    %s1187 = scalar_lea.vmem [#allocation8], 384
    %v1188 = vld [vmem:[%s1187] sm:$0xf]
    %v1189 = vld [vmem:[%s1187 + $0x4] sm:$0xf]
    %v1190 = vld [vmem:[%s1187 + $0x8] sm:$0xf]
    %v1191 = vld [vmem:[%s1187 + $0xc] sm:$0xf]
    %v1192 = vld [vmem:[%s1187 + $0x10] sm:$0xf]
    %v1193 = vld [vmem:[%s1187 + $0x14] sm:$0xf]
    %v1194 = vld [vmem:[%s1187 + $0x18] sm:$0xf]
    %v1195 = vld [vmem:[%s1187 + $0x1c] sm:$0xf]
    %v1196 = vld [vmem:[%s1187 + $0x20] sm:$0xf]
    %v1197 = vld [vmem:[%s1187 + $0x24] sm:$0xf]
    %v1198 = vld [vmem:[%s1187 + $0x28] sm:$0xf]
    %v1199 = vld [vmem:[%s1187 + $0x2c] sm:$0xf]
    %v1200 = vld [vmem:[%s1187 + $0x30] sm:$0xf]
    %v1201 = vld [vmem:[%s1187 + $0x34] sm:$0xf]
    %v1202 = vld [vmem:[%s1187 + $0x38] sm:$0xf]
    %v1203 = vld [vmem:[%s1187 + $0x3c] sm:$0xf]
    %v1208 = vunpack.c.l.b16 %v584
    %v1209 = vunpack.c.l.b16 %v585
    %v1210 = vunpack.c.l.b16 %v586
    %v1211 = vunpack.c.l.b16 %v587
    %v1212 = vpack.c.b16 %v1209, %v1208
    %v1213 = vpack.c.b16 %v1211, %v1210
    %v1232 = vunpack.c.l.b16 %v1188
    %v1233 = vunpack.c.l.b16 %v1189
    %v1234 = vunpack.c.l.b16 %v1190
    %v1235 = vunpack.c.l.b16 %v1191
    %v1236 = vunpack.c.l.b16 %v1192
    %v1237 = vunpack.c.l.b16 %v1193
    %v1238 = vunpack.c.l.b16 %v1194
    %v1239 = vunpack.c.l.b16 %v1195
    %v1240 = vunpack.c.l.b16 %v1196
    %v1241 = vunpack.c.l.b16 %v1197
    %v1242 = vunpack.c.l.b16 %v1198
    %v1243 = vunpack.c.l.b16 %v1199
    %v1244 = vunpack.c.l.b16 %v1200
    %v1245 = vunpack.c.l.b16 %v1201
    %v1246 = vunpack.c.l.b16 %v1202
    %v1247 = vunpack.c.l.b16 %v1203
    %v1248 = vpack.c.b16 %v1233, %v1232
    %v1249 = vpack.c.b16 %v1235, %v1234
    %v1250 = vpack.c.b16 %v1237, %v1236
    %v1251 = vpack.c.b16 %v1239, %v1238
    %v1252 = vpack.c.b16 %v1241, %v1240
    %v1253 = vpack.c.b16 %v1243, %v1242
    %v1254 = vpack.c.b16 %v1245, %v1244
    %v1255 = vpack.c.b16 %v1247, %v1246
    %1264 = vmatpush.bf16.msra.mxu0 %v1255
    %1265 = vmatpush.bf16.msra.mxu0 %v1254
    %1266 = vmatpush.bf16.msra.mxu0 %v1253
    %1267 = vmatpush.bf16.msra.mxu0 %v1252
    %1268 = vmatpush.bf16.msra.mxu0 %v1251
    %1269 = vmatpush.bf16.msra.mxu0 %v1250
    %1270 = vmatpush.bf16.msra.mxu0 %v1249
    %1271 = vmatpush.bf16.msra.mxu0 %v1248
    %1272 = vmatmul.bf16.gmra.mxu0 %v1212
    %v1273 = vpop.f32.mrf.mxu0
    %v1274 = vadd.f32 0.0, %v1273
    %v1275 = vpop.f32.mrf.mxu0
    %v1276 = vadd.f32 0.0, %v1275
    %1277 = vmatmul.bf16.gmra.mxu0 %v1213
    %v1278 = vpop.f32.mrf.mxu0
    %v1279 = vadd.f32 0.0, %v1278
    %v1280 = vpop.f32.mrf.mxu0
    %v1281 = vadd.f32 0.0, %v1280
    %1282 = vdwg.mxu0
    %v1283 = vadd.f32 %v1183, %v1274
    %v1284 = vadd.f32 %v1184, %v1276
    %v1285 = vadd.f32 %v1185, %v1279
    %v1286 = vadd.f32 %v1186, %v1281
    %s1287 = scalar_lea.vmem [#allocation8], 448
    %v1288 = vld [vmem:[%s1287] sm:$0xf]
    %v1289 = vld [vmem:[%s1287 + $0x4] sm:$0xf]
    %v1290 = vld [vmem:[%s1287 + $0x8] sm:$0xf]
    %v1291 = vld [vmem:[%s1287 + $0xc] sm:$0xf]
    %v1292 = vld [vmem:[%s1287 + $0x10] sm:$0xf]
    %v1293 = vld [vmem:[%s1287 + $0x14] sm:$0xf]
    %v1294 = vld [vmem:[%s1287 + $0x18] sm:$0xf]
    %v1295 = vld [vmem:[%s1287 + $0x1c] sm:$0xf]
    %v1296 = vld [vmem:[%s1287 + $0x20] sm:$0xf]
    %v1297 = vld [vmem:[%s1287 + $0x24] sm:$0xf]
    %v1298 = vld [vmem:[%s1287 + $0x28] sm:$0xf]
    %v1299 = vld [vmem:[%s1287 + $0x2c] sm:$0xf]
    %v1300 = vld [vmem:[%s1287 + $0x30] sm:$0xf]
    %v1301 = vld [vmem:[%s1287 + $0x34] sm:$0xf]
    %v1302 = vld [vmem:[%s1287 + $0x38] sm:$0xf]
    %v1303 = vld [vmem:[%s1287 + $0x3c] sm:$0xf]
    %v1308 = vunpack.c.l.b16 %v588
    %v1309 = vunpack.c.l.b16 %v589
    %v1310 = vunpack.c.l.b16 %v590
    %v1311 = vunpack.c.l.b16 %v591
    %v1312 = vpack.c.b16 %v1309, %v1308
    %v1313 = vpack.c.b16 %v1311, %v1310
    %v1332 = vunpack.c.l.b16 %v1288
    %v1333 = vunpack.c.l.b16 %v1289
    %v1334 = vunpack.c.l.b16 %v1290
    %v1335 = vunpack.c.l.b16 %v1291
    %v1336 = vunpack.c.l.b16 %v1292
    %v1337 = vunpack.c.l.b16 %v1293
    %v1338 = vunpack.c.l.b16 %v1294
    %v1339 = vunpack.c.l.b16 %v1295
    %v1340 = vunpack.c.l.b16 %v1296
    %v1341 = vunpack.c.l.b16 %v1297
    %v1342 = vunpack.c.l.b16 %v1298
    %v1343 = vunpack.c.l.b16 %v1299
    %v1344 = vunpack.c.l.b16 %v1300
    %v1345 = vunpack.c.l.b16 %v1301
    %v1346 = vunpack.c.l.b16 %v1302
    %v1347 = vunpack.c.l.b16 %v1303
    %v1348 = vpack.c.b16 %v1333, %v1332
    %v1349 = vpack.c.b16 %v1335, %v1334
    %v1350 = vpack.c.b16 %v1337, %v1336
    %v1351 = vpack.c.b16 %v1339, %v1338
    %v1352 = vpack.c.b16 %v1341, %v1340
    %v1353 = vpack.c.b16 %v1343, %v1342
    %v1354 = vpack.c.b16 %v1345, %v1344
    %v1355 = vpack.c.b16 %v1347, %v1346
    %1364 = vmatpush.bf16.msra.mxu0 %v1355
    %1365 = vmatpush.bf16.msra.mxu0 %v1354
    %1366 = vmatpush.bf16.msra.mxu0 %v1353
    %1367 = vmatpush.bf16.msra.mxu0 %v1352
    %1368 = vmatpush.bf16.msra.mxu0 %v1351
    %1369 = vmatpush.bf16.msra.mxu0 %v1350
    %1370 = vmatpush.bf16.msra.mxu0 %v1349
    %1371 = vmatpush.bf16.msra.mxu0 %v1348
    %1372 = vmatmul.bf16.gmra.mxu0 %v1312
    %v1373 = vpop.f32.mrf.mxu0
    %v1374 = vadd.f32 0.0, %v1373
    %v1375 = vpop.f32.mrf.mxu0
    %v1376 = vadd.f32 0.0, %v1375
    %1377 = vmatmul.bf16.gmra.mxu0 %v1313
    %v1378 = vpop.f32.mrf.mxu0
    %v1379 = vadd.f32 0.0, %v1378
    %v1380 = vpop.f32.mrf.mxu0
    %v1381 = vadd.f32 0.0, %v1380
    %1382 = vdwg.mxu0
    %v1383 = vadd.f32 %v1283, %v1374
    %v1384 = vadd.f32 %v1284, %v1376
    %v1385 = vadd.f32 %v1285, %v1379
    %v1386 = vadd.f32 %v1286, %v1381
    %s1387 = scalar_lea.vmem [#allocation8], 512
    %v1388 = vld [vmem:[%s1387] sm:$0xf]
    %v1389 = vld [vmem:[%s1387 + $0x4] sm:$0xf]
    %v1390 = vld [vmem:[%s1387 + $0x8] sm:$0xf]
    %v1391 = vld [vmem:[%s1387 + $0xc] sm:$0xf]
    %v1392 = vld [vmem:[%s1387 + $0x10] sm:$0xf]
    %v1393 = vld [vmem:[%s1387 + $0x14] sm:$0xf]
    %v1394 = vld [vmem:[%s1387 + $0x18] sm:$0xf]
    %v1395 = vld [vmem:[%s1387 + $0x1c] sm:$0xf]
    %v1396 = vld [vmem:[%s1387 + $0x20] sm:$0xf]
    %v1397 = vld [vmem:[%s1387 + $0x24] sm:$0xf]
    %v1398 = vld [vmem:[%s1387 + $0x28] sm:$0xf]
    %v1399 = vld [vmem:[%s1387 + $0x2c] sm:$0xf]
    %v1400 = vld [vmem:[%s1387 + $0x30] sm:$0xf]
    %v1401 = vld [vmem:[%s1387 + $0x34] sm:$0xf]
    %v1402 = vld [vmem:[%s1387 + $0x38] sm:$0xf]
    %v1403 = vld [vmem:[%s1387 + $0x3c] sm:$0xf]
    %v1408 = vunpack.c.l.b16 %v592
    %v1409 = vunpack.c.l.b16 %v593
    %v1410 = vunpack.c.l.b16 %v594
    %v1411 = vunpack.c.l.b16 %v595
    %v1412 = vpack.c.b16 %v1409, %v1408
    %v1413 = vpack.c.b16 %v1411, %v1410
    %v1432 = vunpack.c.l.b16 %v1388
    %v1433 = vunpack.c.l.b16 %v1389
    %v1434 = vunpack.c.l.b16 %v1390
    %v1435 = vunpack.c.l.b16 %v1391
    %v1436 = vunpack.c.l.b16 %v1392
    %v1437 = vunpack.c.l.b16 %v1393
    %v1438 = vunpack.c.l.b16 %v1394
    %v1439 = vunpack.c.l.b16 %v1395
    %v1440 = vunpack.c.l.b16 %v1396
    %v1441 = vunpack.c.l.b16 %v1397
    %v1442 = vunpack.c.l.b16 %v1398
    %v1443 = vunpack.c.l.b16 %v1399
    %v1444 = vunpack.c.l.b16 %v1400
    %v1445 = vunpack.c.l.b16 %v1401
    %v1446 = vunpack.c.l.b16 %v1402
    %v1447 = vunpack.c.l.b16 %v1403
    %v1448 = vpack.c.b16 %v1433, %v1432
    %v1449 = vpack.c.b16 %v1435, %v1434
    %v1450 = vpack.c.b16 %v1437, %v1436
    %v1451 = vpack.c.b16 %v1439, %v1438
    %v1452 = vpack.c.b16 %v1441, %v1440
    %v1453 = vpack.c.b16 %v1443, %v1442
    %v1454 = vpack.c.b16 %v1445, %v1444
    %v1455 = vpack.c.b16 %v1447, %v1446
    %1464 = vmatpush.bf16.msra.mxu0 %v1455
    %1465 = vmatpush.bf16.msra.mxu0 %v1454
    %1466 = vmatpush.bf16.msra.mxu0 %v1453
    %1467 = vmatpush.bf16.msra.mxu0 %v1452
    %1468 = vmatpush.bf16.msra.mxu0 %v1451
    %1469 = vmatpush.bf16.msra.mxu0 %v1450
    %1470 = vmatpush.bf16.msra.mxu0 %v1449
    %1471 = vmatpush.bf16.msra.mxu0 %v1448
    %1472 = vmatmul.bf16.gmra.mxu0 %v1412
    %v1473 = vpop.f32.mrf.mxu0
    %v1474 = vadd.f32 0.0, %v1473
    %v1475 = vpop.f32.mrf.mxu0
    %v1476 = vadd.f32 0.0, %v1475
    %1477 = vmatmul.bf16.gmra.mxu0 %v1413
    %v1478 = vpop.f32.mrf.mxu0
    %v1479 = vadd.f32 0.0, %v1478
    %v1480 = vpop.f32.mrf.mxu0
    %v1481 = vadd.f32 0.0, %v1480
    %1482 = vdwg.mxu0
    %v1483 = vadd.f32 %v1383, %v1474
    %v1484 = vadd.f32 %v1384, %v1476
    %v1485 = vadd.f32 %v1385, %v1479
    %v1486 = vadd.f32 %v1386, %v1481
    %v1487 = vld [vmem:[%s5] sm:$0x1]
    %v1489 = vperm.slane %v1487, 0
    %v1491 = vadd.f32 %v1483, %v1489
    %v1492 = vadd.f32 %v1484, %v1489
    %v1493 = vadd.f32 %v1485, %v1489
    %v1494 = vadd.f32 %v1486, %v1489
    %v1495 = vmax.f32 %v1491, 0.0
    %v1496 = vmax.f32 %v1492, 0.0
    %v1497 = vmax.f32 %v1493, 0.0
    %v1498 = vmax.f32 %v1494, 0.0
    %v1499 = vpack.c.bf16 %v1496, %v1495
    %v1500 = vpack.c.bf16 %v1498, %v1497
    %v1501 = vld [vmem:[%s6] sm:$0xf]
    %v1502 = vld [vmem:[%s6 + $0x4] sm:$0xf]
    %v1503 = vld [vmem:[%s6 + $0x8] sm:$0xf]
    %v1504 = vld [vmem:[%s6 + $0xc] sm:$0xf]
    %v1505 = vld [vmem:[%s6 + $0x10] sm:$0xf]
    %v1506 = vld [vmem:[%s6 + $0x14] sm:$0xf]
    %v1507 = vld [vmem:[%s6 + $0x18] sm:$0xf]
    %v1508 = vld [vmem:[%s6 + $0x1c] sm:$0xf]
    %v1509 = vld [vmem:[%s6 + $0x20] sm:$0xf]
    %v1519 = vunpack.c.l.b16 %v1501
    %v1520 = vunpack.c.l.b16 %v1502
    %v1521 = vunpack.c.l.b16 %v1503
    %v1522 = vunpack.c.l.b16 %v1504
    %v1523 = vunpack.c.l.b16 %v1505
    %v1524 = vunpack.c.l.b16 %v1506
    %v1525 = vunpack.c.l.b16 %v1507
    %v1526 = vunpack.c.l.b16 %v1508
    %v1527 = vunpack.c.l.b16 %v1509
    %v1528 = vpack.c.b16 %v1520, %v1519
    %v1529 = vpack.c.b16 %v1522, %v1521
    %v1530 = vpack.c.b16 %v1524, %v1523
    %v1531 = vpack.c.b16 %v1526, %v1525
    %v1532 = vpack.c.b16 %v1527, %v1527
    %vm1533 = vcmask 261120
    %v1535 = vsel %vm1533, %v1528, 0
    %v1538 = vsel %vm1533, %v1529, 0
    %v1541 = vsel %vm1533, %v1530, 0
    %v1544 = vsel %vm1533, %v1531, 0
    %v1547 = vsel %vm1533, %v1532, 0
    %1549 = vmatpush.bf16.msra.mxu0 0
    %1550 = vmatpush.bf16.msra.mxu0 0
    %1551 = vmatpush.bf16.msra.mxu0 0
    %1552 = vmatpush.bf16.msra.mxu0 0
    %1553 = vmatpush.bf16.msra.mxu0 0
    %1554 = vmatpush.bf16.msra.mxu0 0
    %1555 = vmatpush.bf16.msra.mxu0 %v1500
    %1556 = vmatpush.bf16.msra.mxu0 %v1499
    %1557 = vmatmul.bf16.gmra.mxu0 %v1535
    %v1558 = vpop.f32.mrf.mxu0
    %v1559 = vadd.f32 0.0, %v1558
    %v1560 = vpop.f32.mrf.mxu0
    %v1561 = vadd.f32 0.0, %v1560
    %1562 = vmatmul.bf16.gmra.mxu0 %v1538
    %v1563 = vpop.f32.mrf.mxu0
    %v1564 = vadd.f32 0.0, %v1563
    %v1565 = vpop.f32.mrf.mxu0
    %v1566 = vadd.f32 0.0, %v1565
    %1567 = vmatmul.bf16.gmra.mxu0 %v1541
    %v1568 = vpop.f32.mrf.mxu0
    %v1569 = vadd.f32 0.0, %v1568
    %v1570 = vpop.f32.mrf.mxu0
    %v1571 = vadd.f32 0.0, %v1570
    %1572 = vmatmul.bf16.gmra.mxu0 %v1544
    %v1573 = vpop.f32.mrf.mxu0
    %v1574 = vadd.f32 0.0, %v1573
    %v1575 = vpop.f32.mrf.mxu0
    %v1576 = vadd.f32 0.0, %v1575
    %1577 = vmatmul.bf16.gmra.mxu0 %v1547
    %v1578 = vpop.f32.mrf.mxu0
    %v1579 = vadd.f32 0.0, %v1578
    %v1580 = vpop.f32.mrf.mxu0
    %1581 = vdwg.mxu0
    %v1582 = vpack.c.bf16 %v1559, %v1559
    %v1583 = vpack.c.bf16 %v1561, %v1561
    %v1584 = vpack.c.bf16 %v1564, %v1564
    %v1585 = vpack.c.bf16 %v1566, %v1566
    %v1586 = vpack.c.bf16 %v1569, %v1569
    %v1587 = vpack.c.bf16 %v1571, %v1571
    %v1588 = vpack.c.bf16 %v1574, %v1574
    %v1589 = vpack.c.bf16 %v1576, %v1576
    %v1590 = vpack.c.bf16 %v1579, %v1579
    %v1591 = vld [vmem:[#allocation10] sm:$0xf]
    %v1592 = vld [vmem:[#allocation10 + $0x4] sm:$0xf]
    %v1593 = vld [vmem:[#allocation10 + $0x8] sm:$0xf]
    %v1594 = vld [vmem:[#allocation10 + $0xc] sm:$0xf]
    %v1595 = vld [vmem:[#allocation10 + $0x10] sm:$0xf]
    %v1596 = vld [vmem:[#allocation10 + $0x14] sm:$0xf]
    %v1597 = vld [vmem:[#allocation10 + $0x18] sm:$0xf]
    %v1598 = vld [vmem:[#allocation10 + $0x1c] sm:$0xf]
    %v1599 = vld [vmem:[#allocation10 + $0x20] sm:$0xf]
    %v1600 = vld [vmem:[#allocation10 + $0x24] sm:$0xf]
    %v1601 = vld [vmem:[#allocation10 + $0x28] sm:$0xf]
    %v1602 = vld [vmem:[#allocation10 + $0x2c] sm:$0xf]
    %v1603 = vld [vmem:[#allocation10 + $0x30] sm:$0xf]
    %v1604 = vld [vmem:[#allocation10 + $0x34] sm:$0xf]
    %v1605 = vld [vmem:[#allocation10 + $0x38] sm:$0xf]
    %v1606 = vld [vmem:[#allocation10 + $0x3c] sm:$0xf]
    %s1607 = scalar_lea.vmem [#allocation10], 64
    %v1608 = vld [vmem:[%s1607] sm:$0xf]
    %v1609 = vld [vmem:[%s1607 + $0x4] sm:$0xf]
    %v1610 = vld [vmem:[%s1607 + $0x8] sm:$0xf]
    %v1611 = vld [vmem:[%s1607 + $0xc] sm:$0xf]
    %v1612 = vld [vmem:[%s1607 + $0x10] sm:$0xf]
    %v1613 = vld [vmem:[%s1607 + $0x14] sm:$0xf]
    %v1614 = vld [vmem:[%s1607 + $0x18] sm:$0xf]
    %v1615 = vld [vmem:[%s1607 + $0x1c] sm:$0xf]
    %v1616 = vld [vmem:[%s1607 + $0x20] sm:$0xf]
    %v1617 = vld [vmem:[%s1607 + $0x24] sm:$0xf]
    %v1618 = vld [vmem:[%s1607 + $0x28] sm:$0xf]
    %v1619 = vld [vmem:[%s1607 + $0x2c] sm:$0xf]
    %v1620 = vld [vmem:[%s1607 + $0x30] sm:$0xf]
    %v1621 = vld [vmem:[%s1607 + $0x34] sm:$0xf]
    %v1622 = vld [vmem:[%s1607 + $0x38] sm:$0xf]
    %v1623 = vld [vmem:[%s1607 + $0x3c] sm:$0xf]
    %v1640 = vunpack.c.l.b16 %v1608
    %v1641 = vunpack.c.l.b16 %v1609
    %v1642 = vunpack.c.l.b16 %v1610
    %v1643 = vunpack.c.l.b16 %v1611
    %v1644 = vunpack.c.l.b16 %v1612
    %v1645 = vunpack.c.l.b16 %v1613
    %v1646 = vunpack.c.l.b16 %v1614
    %v1647 = vunpack.c.l.b16 %v1615
    %v1648 = vunpack.c.l.b16 %v1616
    %v1649 = vunpack.c.l.b16 %v1617
    %v1650 = vunpack.c.l.b16 %v1618
    %v1651 = vunpack.c.l.b16 %v1619
    %v1652 = vunpack.c.l.b16 %v1620
    %v1653 = vunpack.c.l.b16 %v1621
    %v1654 = vunpack.c.l.b16 %v1622
    %v1655 = vunpack.c.l.b16 %v1623
    %v1656 = vpack.c.b16 %v1641, %v1640
    %v1657 = vpack.c.b16 %v1643, %v1642
    %v1658 = vpack.c.b16 %v1645, %v1644
    %v1659 = vpack.c.b16 %v1647, %v1646
    %v1660 = vpack.c.b16 %v1649, %v1648
    %v1661 = vpack.c.b16 %v1651, %v1650
    %v1662 = vpack.c.b16 %v1653, %v1652
    %v1663 = vpack.c.b16 %v1655, %v1654
    %1672 = vmatpush.bf16.msra.mxu0 %v1663
    %1673 = vmatpush.bf16.msra.mxu0 %v1662
    %1674 = vmatpush.bf16.msra.mxu0 %v1661
    %1675 = vmatpush.bf16.msra.mxu0 %v1660
    %1676 = vmatpush.bf16.msra.mxu0 %v1659
    %1677 = vmatpush.bf16.msra.mxu0 %v1658
    %1678 = vmatpush.bf16.msra.mxu0 %v1657
    %1679 = vmatpush.bf16.msra.mxu0 %v1656
    %1680 = vmatmul.bf16.gmra.mxu0 %v1583
    %v1681 = vpop.f32.mrf.mxu0
    %v1682 = vadd.f32 0.0, %v1681
    %v1683 = vpop.f32.mrf.mxu0
    %1684 = vdwg.mxu0
    %v1701 = vunpack.c.l.b16 %v1591
    %v1702 = vunpack.c.l.b16 %v1592
    %v1703 = vunpack.c.l.b16 %v1593
    %v1704 = vunpack.c.l.b16 %v1594
    %v1705 = vunpack.c.l.b16 %v1595
    %v1706 = vunpack.c.l.b16 %v1596
    %v1707 = vunpack.c.l.b16 %v1597
    %v1708 = vunpack.c.l.b16 %v1598
    %v1709 = vunpack.c.l.b16 %v1599
    %v1710 = vunpack.c.l.b16 %v1600
    %v1711 = vunpack.c.l.b16 %v1601
    %v1712 = vunpack.c.l.b16 %v1602
    %v1713 = vunpack.c.l.b16 %v1603
    %v1714 = vunpack.c.l.b16 %v1604
    %v1715 = vunpack.c.l.b16 %v1605
    %v1716 = vunpack.c.l.b16 %v1606
    %v1717 = vpack.c.b16 %v1702, %v1701
    %v1718 = vpack.c.b16 %v1704, %v1703
    %v1719 = vpack.c.b16 %v1706, %v1705
    %v1720 = vpack.c.b16 %v1708, %v1707
    %v1721 = vpack.c.b16 %v1710, %v1709
    %v1722 = vpack.c.b16 %v1712, %v1711
    %v1723 = vpack.c.b16 %v1714, %v1713
    %v1724 = vpack.c.b16 %v1716, %v1715
    %1733 = vmatpush.bf16.msra.mxu0 %v1724
    %1734 = vmatpush.bf16.msra.mxu0 %v1723
    %1735 = vmatpush.bf16.msra.mxu0 %v1722
    %1736 = vmatpush.bf16.msra.mxu0 %v1721
    %1737 = vmatpush.bf16.msra.mxu0 %v1720
    %1738 = vmatpush.bf16.msra.mxu0 %v1719
    %1739 = vmatpush.bf16.msra.mxu0 %v1718
    %1740 = vmatpush.bf16.msra.mxu0 %v1717
    %1741 = vmatmul.bf16.gmra.mxu0 %v1582
    %v1742 = vpop.f32.mrf.mxu0
    %v1743 = vadd.f32 %v1682, %v1742
    %v1744 = vpop.f32.mrf.mxu0
    %1745 = vdwg.mxu0
    %s1746 = scalar_lea.vmem [#allocation10], 128
    %v1747 = vld [vmem:[%s1746] sm:$0xf]
    %v1748 = vld [vmem:[%s1746 + $0x4] sm:$0xf]
    %v1749 = vld [vmem:[%s1746 + $0x8] sm:$0xf]
    %v1750 = vld [vmem:[%s1746 + $0xc] sm:$0xf]
    %v1751 = vld [vmem:[%s1746 + $0x10] sm:$0xf]
    %v1752 = vld [vmem:[%s1746 + $0x14] sm:$0xf]
    %v1753 = vld [vmem:[%s1746 + $0x18] sm:$0xf]
    %v1754 = vld [vmem:[%s1746 + $0x1c] sm:$0xf]
    %v1755 = vld [vmem:[%s1746 + $0x20] sm:$0xf]
    %v1756 = vld [vmem:[%s1746 + $0x24] sm:$0xf]
    %v1757 = vld [vmem:[%s1746 + $0x28] sm:$0xf]
    %v1758 = vld [vmem:[%s1746 + $0x2c] sm:$0xf]
    %v1759 = vld [vmem:[%s1746 + $0x30] sm:$0xf]
    %v1760 = vld [vmem:[%s1746 + $0x34] sm:$0xf]
    %v1761 = vld [vmem:[%s1746 + $0x38] sm:$0xf]
    %v1762 = vld [vmem:[%s1746 + $0x3c] sm:$0xf]
    %v1779 = vunpack.c.l.b16 %v1747
    %v1780 = vunpack.c.l.b16 %v1748
    %v1781 = vunpack.c.l.b16 %v1749
    %v1782 = vunpack.c.l.b16 %v1750
    %v1783 = vunpack.c.l.b16 %v1751
    %v1784 = vunpack.c.l.b16 %v1752
    %v1785 = vunpack.c.l.b16 %v1753
    %v1786 = vunpack.c.l.b16 %v1754
    %v1787 = vunpack.c.l.b16 %v1755
    %v1788 = vunpack.c.l.b16 %v1756
    %v1789 = vunpack.c.l.b16 %v1757
    %v1790 = vunpack.c.l.b16 %v1758
    %v1791 = vunpack.c.l.b16 %v1759
    %v1792 = vunpack.c.l.b16 %v1760
    %v1793 = vunpack.c.l.b16 %v1761
    %v1794 = vunpack.c.l.b16 %v1762
    %v1795 = vpack.c.b16 %v1780, %v1779
    %v1796 = vpack.c.b16 %v1782, %v1781
    %v1797 = vpack.c.b16 %v1784, %v1783
    %v1798 = vpack.c.b16 %v1786, %v1785
    %v1799 = vpack.c.b16 %v1788, %v1787
    %v1800 = vpack.c.b16 %v1790, %v1789
    %v1801 = vpack.c.b16 %v1792, %v1791
    %v1802 = vpack.c.b16 %v1794, %v1793
    %1811 = vmatpush.bf16.msra.mxu0 %v1802
    %1812 = vmatpush.bf16.msra.mxu0 %v1801
    %1813 = vmatpush.bf16.msra.mxu0 %v1800
    %1814 = vmatpush.bf16.msra.mxu0 %v1799
    %1815 = vmatpush.bf16.msra.mxu0 %v1798
    %1816 = vmatpush.bf16.msra.mxu0 %v1797
    %1817 = vmatpush.bf16.msra.mxu0 %v1796
    %1818 = vmatpush.bf16.msra.mxu0 %v1795
    %1819 = vmatmul.bf16.gmra.mxu0 %v1584
    %v1820 = vpop.f32.mrf.mxu0
    %v1821 = vadd.f32 0.0, %v1820
    %v1822 = vpop.f32.mrf.mxu0
    %1823 = vdwg.mxu0
    %v1824 = vadd.f32 %v1743, %v1821
    %s1825 = scalar_lea.vmem [#allocation10], 192
    %v1826 = vld [vmem:[%s1825] sm:$0xf]
    %v1827 = vld [vmem:[%s1825 + $0x4] sm:$0xf]
    %v1828 = vld [vmem:[%s1825 + $0x8] sm:$0xf]
    %v1829 = vld [vmem:[%s1825 + $0xc] sm:$0xf]
    %v1830 = vld [vmem:[%s1825 + $0x10] sm:$0xf]
    %v1831 = vld [vmem:[%s1825 + $0x14] sm:$0xf]
    %v1832 = vld [vmem:[%s1825 + $0x18] sm:$0xf]
    %v1833 = vld [vmem:[%s1825 + $0x1c] sm:$0xf]
    %v1834 = vld [vmem:[%s1825 + $0x20] sm:$0xf]
    %v1835 = vld [vmem:[%s1825 + $0x24] sm:$0xf]
    %v1836 = vld [vmem:[%s1825 + $0x28] sm:$0xf]
    %v1837 = vld [vmem:[%s1825 + $0x2c] sm:$0xf]
    %v1838 = vld [vmem:[%s1825 + $0x30] sm:$0xf]
    %v1839 = vld [vmem:[%s1825 + $0x34] sm:$0xf]
    %v1840 = vld [vmem:[%s1825 + $0x38] sm:$0xf]
    %v1841 = vld [vmem:[%s1825 + $0x3c] sm:$0xf]
    %v1858 = vunpack.c.l.b16 %v1826
    %v1859 = vunpack.c.l.b16 %v1827
    %v1860 = vunpack.c.l.b16 %v1828
    %v1861 = vunpack.c.l.b16 %v1829
    %v1862 = vunpack.c.l.b16 %v1830
    %v1863 = vunpack.c.l.b16 %v1831
    %v1864 = vunpack.c.l.b16 %v1832
    %v1865 = vunpack.c.l.b16 %v1833
    %v1866 = vunpack.c.l.b16 %v1834
    %v1867 = vunpack.c.l.b16 %v1835
    %v1868 = vunpack.c.l.b16 %v1836
    %v1869 = vunpack.c.l.b16 %v1837
    %v1870 = vunpack.c.l.b16 %v1838
    %v1871 = vunpack.c.l.b16 %v1839
    %v1872 = vunpack.c.l.b16 %v1840
    %v1873 = vunpack.c.l.b16 %v1841
    %v1874 = vpack.c.b16 %v1859, %v1858
    %v1875 = vpack.c.b16 %v1861, %v1860
    %v1876 = vpack.c.b16 %v1863, %v1862
    %v1877 = vpack.c.b16 %v1865, %v1864
    %v1878 = vpack.c.b16 %v1867, %v1866
    %v1879 = vpack.c.b16 %v1869, %v1868
    %v1880 = vpack.c.b16 %v1871, %v1870
    %v1881 = vpack.c.b16 %v1873, %v1872
    %1890 = vmatpush.bf16.msra.mxu0 %v1881
    %1891 = vmatpush.bf16.msra.mxu0 %v1880
    %1892 = vmatpush.bf16.msra.mxu0 %v1879
    %1893 = vmatpush.bf16.msra.mxu0 %v1878
    %1894 = vmatpush.bf16.msra.mxu0 %v1877
    %1895 = vmatpush.bf16.msra.mxu0 %v1876
    %1896 = vmatpush.bf16.msra.mxu0 %v1875
    %1897 = vmatpush.bf16.msra.mxu0 %v1874
    %1898 = vmatmul.bf16.gmra.mxu0 %v1585
    %v1899 = vpop.f32.mrf.mxu0
    %v1900 = vadd.f32 0.0, %v1899
    %v1901 = vpop.f32.mrf.mxu0
    %1902 = vdwg.mxu0
    %v1903 = vadd.f32 %v1824, %v1900
    %s1904 = scalar_lea.vmem [#allocation10], 256
    %v1905 = vld [vmem:[%s1904] sm:$0xf]
    %v1906 = vld [vmem:[%s1904 + $0x4] sm:$0xf]
    %v1907 = vld [vmem:[%s1904 + $0x8] sm:$0xf]
    %v1908 = vld [vmem:[%s1904 + $0xc] sm:$0xf]
    %v1909 = vld [vmem:[%s1904 + $0x10] sm:$0xf]
    %v1910 = vld [vmem:[%s1904 + $0x14] sm:$0xf]
    %v1911 = vld [vmem:[%s1904 + $0x18] sm:$0xf]
    %v1912 = vld [vmem:[%s1904 + $0x1c] sm:$0xf]
    %v1913 = vld [vmem:[%s1904 + $0x20] sm:$0xf]
    %v1914 = vld [vmem:[%s1904 + $0x24] sm:$0xf]
    %v1915 = vld [vmem:[%s1904 + $0x28] sm:$0xf]
    %v1916 = vld [vmem:[%s1904 + $0x2c] sm:$0xf]
    %v1917 = vld [vmem:[%s1904 + $0x30] sm:$0xf]
    %v1918 = vld [vmem:[%s1904 + $0x34] sm:$0xf]
    %v1919 = vld [vmem:[%s1904 + $0x38] sm:$0xf]
    %v1920 = vld [vmem:[%s1904 + $0x3c] sm:$0xf]
    %v1937 = vunpack.c.l.b16 %v1905
    %v1938 = vunpack.c.l.b16 %v1906
    %v1939 = vunpack.c.l.b16 %v1907
    %v1940 = vunpack.c.l.b16 %v1908
    %v1941 = vunpack.c.l.b16 %v1909
    %v1942 = vunpack.c.l.b16 %v1910
    %v1943 = vunpack.c.l.b16 %v1911
    %v1944 = vunpack.c.l.b16 %v1912
    %v1945 = vunpack.c.l.b16 %v1913
    %v1946 = vunpack.c.l.b16 %v1914
    %v1947 = vunpack.c.l.b16 %v1915
    %v1948 = vunpack.c.l.b16 %v1916
    %v1949 = vunpack.c.l.b16 %v1917
    %v1950 = vunpack.c.l.b16 %v1918
    %v1951 = vunpack.c.l.b16 %v1919
    %v1952 = vunpack.c.l.b16 %v1920
    %v1953 = vpack.c.b16 %v1938, %v1937
    %v1954 = vpack.c.b16 %v1940, %v1939
    %v1955 = vpack.c.b16 %v1942, %v1941
    %v1956 = vpack.c.b16 %v1944, %v1943
    %v1957 = vpack.c.b16 %v1946, %v1945
    %v1958 = vpack.c.b16 %v1948, %v1947
    %v1959 = vpack.c.b16 %v1950, %v1949
    %v1960 = vpack.c.b16 %v1952, %v1951
    %1969 = vmatpush.bf16.msra.mxu0 %v1960
    %1970 = vmatpush.bf16.msra.mxu0 %v1959
    %1971 = vmatpush.bf16.msra.mxu0 %v1958
    %1972 = vmatpush.bf16.msra.mxu0 %v1957
    %1973 = vmatpush.bf16.msra.mxu0 %v1956
    %1974 = vmatpush.bf16.msra.mxu0 %v1955
    %1975 = vmatpush.bf16.msra.mxu0 %v1954
    %1976 = vmatpush.bf16.msra.mxu0 %v1953
    %1977 = vmatmul.bf16.gmra.mxu0 %v1586
    %v1978 = vpop.f32.mrf.mxu0
    %v1979 = vadd.f32 0.0, %v1978
    %v1980 = vpop.f32.mrf.mxu0
    %1981 = vdwg.mxu0
    %v1982 = vadd.f32 %v1903, %v1979
    %s1983 = scalar_lea.vmem [#allocation10], 320
    %v1984 = vld [vmem:[%s1983] sm:$0xf]
    %v1985 = vld [vmem:[%s1983 + $0x4] sm:$0xf]
    %v1986 = vld [vmem:[%s1983 + $0x8] sm:$0xf]
    %v1987 = vld [vmem:[%s1983 + $0xc] sm:$0xf]
    %v1988 = vld [vmem:[%s1983 + $0x10] sm:$0xf]
    %v1989 = vld [vmem:[%s1983 + $0x14] sm:$0xf]
    %v1990 = vld [vmem:[%s1983 + $0x18] sm:$0xf]
    %v1991 = vld [vmem:[%s1983 + $0x1c] sm:$0xf]
    %v1992 = vld [vmem:[%s1983 + $0x20] sm:$0xf]
    %v1993 = vld [vmem:[%s1983 + $0x24] sm:$0xf]
    %v1994 = vld [vmem:[%s1983 + $0x28] sm:$0xf]
    %v1995 = vld [vmem:[%s1983 + $0x2c] sm:$0xf]
    %v1996 = vld [vmem:[%s1983 + $0x30] sm:$0xf]
    %v1997 = vld [vmem:[%s1983 + $0x34] sm:$0xf]
    %v1998 = vld [vmem:[%s1983 + $0x38] sm:$0xf]
    %v1999 = vld [vmem:[%s1983 + $0x3c] sm:$0xf]
    %v2016 = vunpack.c.l.b16 %v1984
    %v2017 = vunpack.c.l.b16 %v1985
    %v2018 = vunpack.c.l.b16 %v1986
    %v2019 = vunpack.c.l.b16 %v1987
    %v2020 = vunpack.c.l.b16 %v1988
    %v2021 = vunpack.c.l.b16 %v1989
    %v2022 = vunpack.c.l.b16 %v1990
    %v2023 = vunpack.c.l.b16 %v1991
    %v2024 = vunpack.c.l.b16 %v1992
    %v2025 = vunpack.c.l.b16 %v1993
    %v2026 = vunpack.c.l.b16 %v1994
    %v2027 = vunpack.c.l.b16 %v1995
    %v2028 = vunpack.c.l.b16 %v1996
    %v2029 = vunpack.c.l.b16 %v1997
    %v2030 = vunpack.c.l.b16 %v1998
    %v2031 = vunpack.c.l.b16 %v1999
    %v2032 = vpack.c.b16 %v2017, %v2016
    %v2033 = vpack.c.b16 %v2019, %v2018
    %v2034 = vpack.c.b16 %v2021, %v2020
    %v2035 = vpack.c.b16 %v2023, %v2022
    %v2036 = vpack.c.b16 %v2025, %v2024
    %v2037 = vpack.c.b16 %v2027, %v2026
    %v2038 = vpack.c.b16 %v2029, %v2028
    %v2039 = vpack.c.b16 %v2031, %v2030
    %2048 = vmatpush.bf16.msra.mxu0 %v2039
    %2049 = vmatpush.bf16.msra.mxu0 %v2038
    %2050 = vmatpush.bf16.msra.mxu0 %v2037
    %2051 = vmatpush.bf16.msra.mxu0 %v2036
    %2052 = vmatpush.bf16.msra.mxu0 %v2035
    %2053 = vmatpush.bf16.msra.mxu0 %v2034
    %2054 = vmatpush.bf16.msra.mxu0 %v2033
    %2055 = vmatpush.bf16.msra.mxu0 %v2032
    %2056 = vmatmul.bf16.gmra.mxu0 %v1587
    %v2057 = vpop.f32.mrf.mxu0
    %v2058 = vadd.f32 0.0, %v2057
    %v2059 = vpop.f32.mrf.mxu0
    %2060 = vdwg.mxu0
    %v2061 = vadd.f32 %v1982, %v2058
    %s2062 = scalar_lea.vmem [#allocation10], 384
    %v2063 = vld [vmem:[%s2062] sm:$0xf]
    %v2064 = vld [vmem:[%s2062 + $0x4] sm:$0xf]
    %v2065 = vld [vmem:[%s2062 + $0x8] sm:$0xf]
    %v2066 = vld [vmem:[%s2062 + $0xc] sm:$0xf]
    %v2067 = vld [vmem:[%s2062 + $0x10] sm:$0xf]
    %v2068 = vld [vmem:[%s2062 + $0x14] sm:$0xf]
    %v2069 = vld [vmem:[%s2062 + $0x18] sm:$0xf]
    %v2070 = vld [vmem:[%s2062 + $0x1c] sm:$0xf]
    %v2071 = vld [vmem:[%s2062 + $0x20] sm:$0xf]
    %v2072 = vld [vmem:[%s2062 + $0x24] sm:$0xf]
    %v2073 = vld [vmem:[%s2062 + $0x28] sm:$0xf]
    %v2074 = vld [vmem:[%s2062 + $0x2c] sm:$0xf]
    %v2075 = vld [vmem:[%s2062 + $0x30] sm:$0xf]
    %v2076 = vld [vmem:[%s2062 + $0x34] sm:$0xf]
    %v2077 = vld [vmem:[%s2062 + $0x38] sm:$0xf]
    %v2078 = vld [vmem:[%s2062 + $0x3c] sm:$0xf]
    %v2095 = vunpack.c.l.b16 %v2063
    %v2096 = vunpack.c.l.b16 %v2064
    %v2097 = vunpack.c.l.b16 %v2065
    %v2098 = vunpack.c.l.b16 %v2066
    %v2099 = vunpack.c.l.b16 %v2067
    %v2100 = vunpack.c.l.b16 %v2068
    %v2101 = vunpack.c.l.b16 %v2069
    %v2102 = vunpack.c.l.b16 %v2070
    %v2103 = vunpack.c.l.b16 %v2071
    %v2104 = vunpack.c.l.b16 %v2072
    %v2105 = vunpack.c.l.b16 %v2073
    %v2106 = vunpack.c.l.b16 %v2074
    %v2107 = vunpack.c.l.b16 %v2075
    %v2108 = vunpack.c.l.b16 %v2076
    %v2109 = vunpack.c.l.b16 %v2077
    %v2110 = vunpack.c.l.b16 %v2078
    %v2111 = vpack.c.b16 %v2096, %v2095
    %v2112 = vpack.c.b16 %v2098, %v2097
    %v2113 = vpack.c.b16 %v2100, %v2099
    %v2114 = vpack.c.b16 %v2102, %v2101
    %v2115 = vpack.c.b16 %v2104, %v2103
    %v2116 = vpack.c.b16 %v2106, %v2105
    %v2117 = vpack.c.b16 %v2108, %v2107
    %v2118 = vpack.c.b16 %v2110, %v2109
    %2127 = vmatpush.bf16.msra.mxu0 %v2118
    %2128 = vmatpush.bf16.msra.mxu0 %v2117
    %2129 = vmatpush.bf16.msra.mxu0 %v2116
    %2130 = vmatpush.bf16.msra.mxu0 %v2115
    %2131 = vmatpush.bf16.msra.mxu0 %v2114
    %2132 = vmatpush.bf16.msra.mxu0 %v2113
    %2133 = vmatpush.bf16.msra.mxu0 %v2112
    %2134 = vmatpush.bf16.msra.mxu0 %v2111
    %2135 = vmatmul.bf16.gmra.mxu0 %v1588
    %v2136 = vpop.f32.mrf.mxu0
    %v2137 = vadd.f32 0.0, %v2136
    %v2138 = vpop.f32.mrf.mxu0
    %2139 = vdwg.mxu0
    %v2140 = vadd.f32 %v2061, %v2137
    %s2141 = scalar_lea.vmem [#allocation10], 448
    %v2142 = vld [vmem:[%s2141] sm:$0xf]
    %v2143 = vld [vmem:[%s2141 + $0x4] sm:$0xf]
    %v2144 = vld [vmem:[%s2141 + $0x8] sm:$0xf]
    %v2145 = vld [vmem:[%s2141 + $0xc] sm:$0xf]
    %v2146 = vld [vmem:[%s2141 + $0x10] sm:$0xf]
    %v2147 = vld [vmem:[%s2141 + $0x14] sm:$0xf]
    %v2148 = vld [vmem:[%s2141 + $0x18] sm:$0xf]
    %v2149 = vld [vmem:[%s2141 + $0x1c] sm:$0xf]
    %v2150 = vld [vmem:[%s2141 + $0x20] sm:$0xf]
    %v2151 = vld [vmem:[%s2141 + $0x24] sm:$0xf]
    %v2152 = vld [vmem:[%s2141 + $0x28] sm:$0xf]
    %v2153 = vld [vmem:[%s2141 + $0x2c] sm:$0xf]
    %v2154 = vld [vmem:[%s2141 + $0x30] sm:$0xf]
    %v2155 = vld [vmem:[%s2141 + $0x34] sm:$0xf]
    %v2156 = vld [vmem:[%s2141 + $0x38] sm:$0xf]
    %v2157 = vld [vmem:[%s2141 + $0x3c] sm:$0xf]
    %v2174 = vunpack.c.l.b16 %v2142
    %v2175 = vunpack.c.l.b16 %v2143
    %v2176 = vunpack.c.l.b16 %v2144
    %v2177 = vunpack.c.l.b16 %v2145
    %v2178 = vunpack.c.l.b16 %v2146
    %v2179 = vunpack.c.l.b16 %v2147
    %v2180 = vunpack.c.l.b16 %v2148
    %v2181 = vunpack.c.l.b16 %v2149
    %v2182 = vunpack.c.l.b16 %v2150
    %v2183 = vunpack.c.l.b16 %v2151
    %v2184 = vunpack.c.l.b16 %v2152
    %v2185 = vunpack.c.l.b16 %v2153
    %v2186 = vunpack.c.l.b16 %v2154
    %v2187 = vunpack.c.l.b16 %v2155
    %v2188 = vunpack.c.l.b16 %v2156
    %v2189 = vunpack.c.l.b16 %v2157
    %v2190 = vpack.c.b16 %v2175, %v2174
    %v2191 = vpack.c.b16 %v2177, %v2176
    %v2192 = vpack.c.b16 %v2179, %v2178
    %v2193 = vpack.c.b16 %v2181, %v2180
    %v2194 = vpack.c.b16 %v2183, %v2182
    %v2195 = vpack.c.b16 %v2185, %v2184
    %v2196 = vpack.c.b16 %v2187, %v2186
    %v2197 = vpack.c.b16 %v2189, %v2188
    %2206 = vmatpush.bf16.msra.mxu0 %v2197
    %2207 = vmatpush.bf16.msra.mxu0 %v2196
    %2208 = vmatpush.bf16.msra.mxu0 %v2195
    %2209 = vmatpush.bf16.msra.mxu0 %v2194
    %2210 = vmatpush.bf16.msra.mxu0 %v2193
    %2211 = vmatpush.bf16.msra.mxu0 %v2192
    %2212 = vmatpush.bf16.msra.mxu0 %v2191
    %2213 = vmatpush.bf16.msra.mxu0 %v2190
    %2214 = vmatmul.bf16.gmra.mxu0 %v1589
    %v2215 = vpop.f32.mrf.mxu0
    %v2216 = vadd.f32 0.0, %v2215
    %v2217 = vpop.f32.mrf.mxu0
    %2218 = vdwg.mxu0
    %v2219 = vadd.f32 %v2140, %v2216
    %s2220 = scalar_lea.vmem [#allocation10], 512
    %v2221 = vld [vmem:[%s2220] sm:$0xf]
    %v2222 = vld [vmem:[%s2220 + $0x4] sm:$0xf]
    %v2223 = vld [vmem:[%s2220 + $0x8] sm:$0xf]
    %v2224 = vld [vmem:[%s2220 + $0xc] sm:$0xf]
    %v2225 = vld [vmem:[%s2220 + $0x10] sm:$0xf]
    %v2226 = vld [vmem:[%s2220 + $0x14] sm:$0xf]
    %v2227 = vld [vmem:[%s2220 + $0x18] sm:$0xf]
    %v2228 = vld [vmem:[%s2220 + $0x1c] sm:$0xf]
    %v2229 = vld [vmem:[%s2220 + $0x20] sm:$0xf]
    %v2230 = vld [vmem:[%s2220 + $0x24] sm:$0xf]
    %v2231 = vld [vmem:[%s2220 + $0x28] sm:$0xf]
    %v2232 = vld [vmem:[%s2220 + $0x2c] sm:$0xf]
    %v2233 = vld [vmem:[%s2220 + $0x30] sm:$0xf]
    %v2234 = vld [vmem:[%s2220 + $0x34] sm:$0xf]
    %v2235 = vld [vmem:[%s2220 + $0x38] sm:$0xf]
    %v2236 = vld [vmem:[%s2220 + $0x3c] sm:$0xf]
    %v2253 = vunpack.c.l.b16 %v2221
    %v2254 = vunpack.c.l.b16 %v2222
    %v2255 = vunpack.c.l.b16 %v2223
    %v2256 = vunpack.c.l.b16 %v2224
    %v2257 = vunpack.c.l.b16 %v2225
    %v2258 = vunpack.c.l.b16 %v2226
    %v2259 = vunpack.c.l.b16 %v2227
    %v2260 = vunpack.c.l.b16 %v2228
    %v2261 = vunpack.c.l.b16 %v2229
    %v2262 = vunpack.c.l.b16 %v2230
    %v2263 = vunpack.c.l.b16 %v2231
    %v2264 = vunpack.c.l.b16 %v2232
    %v2265 = vunpack.c.l.b16 %v2233
    %v2266 = vunpack.c.l.b16 %v2234
    %v2267 = vunpack.c.l.b16 %v2235
    %v2268 = vunpack.c.l.b16 %v2236
    %v2269 = vpack.c.b16 %v2254, %v2253
    %v2270 = vpack.c.b16 %v2256, %v2255
    %v2271 = vpack.c.b16 %v2258, %v2257
    %v2272 = vpack.c.b16 %v2260, %v2259
    %v2273 = vpack.c.b16 %v2262, %v2261
    %v2274 = vpack.c.b16 %v2264, %v2263
    %v2275 = vpack.c.b16 %v2266, %v2265
    %v2276 = vpack.c.b16 %v2268, %v2267
    %2285 = vmatpush.bf16.msra.mxu0 %v2276
    %2286 = vmatpush.bf16.msra.mxu0 %v2275
    %2287 = vmatpush.bf16.msra.mxu0 %v2274
    %2288 = vmatpush.bf16.msra.mxu0 %v2273
    %2289 = vmatpush.bf16.msra.mxu0 %v2272
    %2290 = vmatpush.bf16.msra.mxu0 %v2271
    %2291 = vmatpush.bf16.msra.mxu0 %v2270
    %2292 = vmatpush.bf16.msra.mxu0 %v2269
    %2293 = vmatmul.bf16.gmra.mxu0 %v1590
    %v2294 = vpop.f32.mrf.mxu0
    %v2295 = vadd.f32 0.0, %v2294
    %v2296 = vpop.f32.mrf.mxu0
    %2297 = vdwg.mxu0
    %v2298 = vadd.f32 %v2219, %v2295
    %v2299 = vld [vmem:[%s8] sm:$0x1]
    %v2301 = vperm.slane %v2299, 0
    %v2303 = vadd.f32 %v2298, %v2301
    %v2304 = vmax.f32 %v2303, 0.0
    %2305 = vst [vmem:[#allocation11] sm:$0xff] %v2304
    // Predicated region
    $region58: #{tpu_custom_call.1} parent=1 // pred_check
      _
    $region59: #{tpu_custom_call.1} parent=1 // pred_check_branch
      %2307 = sbr.rel (0) target = $region61
    $region60: #{tpu_custom_call.1} parent=1 // pred_region
      %2309 = vsyncadd [#allocation4], 0
      %s2311 = sshll.u32 [#allocation11], 4
      %s2312 = int_to_ptr.vmem [resolvable:$true] %s2311
      %s2313 = sshll.u32 %s9, 4
      %s2314 = int_to_ptr.hbm [resolvable:$true] %s2313
      %2316 = dma.vmem_to_hbm [thread:$0]  %s2312, 128, %s2314, [#allocation4]
    $region61: #{tpu_custom_call.1} parent=1 // pred_fallthru
      _
    // Predicated region
    $region62: #{tpu_custom_call.1} parent=1 // pred_check
      _
    $region63: #{tpu_custom_call.1} parent=1 // pred_check_branch
      %2318 = sbr.rel (0) target = $region65
    $region64: #{tpu_custom_call.1} parent=1 // pred_region
      %2320 = dma.done [#allocation4], 128
    $region65: #{tpu_custom_call.1} parent=1 // pred_fallthru
      _
    %2321 = vsyncpa [#allocation3], 1
    %2322 = vsyncpa [#allocation6], 1
    %2323 = vsyncpa [#allocation9], 1
    %2324 = vsyncpa [#allocation4], 1

</llo_original>
